<compile_context>
chip_gen: v7x
topology: tpu7x:2x2x1
jax: 0.10.0
libtpu: 0.0.40
codegen_flags: <defaults>
</compile_context>

<pallas_src>
import functools

import jax
import jax.numpy as jnp
from jax.experimental import pallas as pl
from jax.experimental.pallas import tpu as pltpu


# ----------------------------- Kernel --------------------------------------- #

def _layer_norm(y, gamma, beta):
    mu = jnp.mean(y, axis=-1, keepdims=True)
    var = jnp.mean((y - mu) ** 2, axis=-1, keepdims=True)
    return (y - mu) * jax.lax.rsqrt(var + jnp.float32(1e-5)) * gamma + beta


def encoder_layer_kernel(xq_ref, xs_ref, mask_ref,
                         wq_ref, bq_ref, wkv_ref, bkv_ref,
                         wo_ref, bo_ref,
                         w1_ref, b1_ref, w2_ref, b2_ref,
                         gamma_ref, beta_ref,
                         o_ref,
                         k_scr, v_scr, heads_scr,
                         *, num_heads):
    """Fused MHA + residual + LN, FFN + residual + LN for one (batch, q-tile)."""
    qi = pl.program_id(1)
    D = xq_ref.shape[2]
    H = num_heads
    Dh = D // H

    # ---- K/V for the FULL sequence of this batch element, computed once ----
    @pl.when(qi == 0)
    def _():
        xs = xs_ref[0].astype(jnp.bfloat16)                               # (S, D)
        kv = jnp.dot(xs, wkv_ref[...],
                     preferred_element_type=jnp.float32) + bkv_ref[...]   # (S, 2D)
        k_scr[...] = kv[:, :D].astype(jnp.bfloat16)
        v_scr[...] = kv[:, D:].astype(jnp.bfloat16)

    xq = xq_ref[0].astype(jnp.float32)                                    # (tq, D)
    xqb = xq.astype(jnp.bfloat16)

    # ---- full-width Q projection for this query tile ----
    q = (jnp.dot(xqb, wq_ref[...], preferred_element_type=jnp.float32)
         + bq_ref[...]).astype(jnp.bfloat16)                              # (tq, D)

    # key-padding bias, hoisted out of the head loop: (1, S), -1e9 where padded
    bias = mask_ref[0].astype(jnp.float32) * jnp.float32(-1e9)
    scale = jnp.float32(1.0) / jnp.sqrt(jnp.float32(Dh))

    k = k_scr[...]                                                        # (S, D) bf16
    v = v_scr[...]

    # ---- per-head scores / softmax / PV; head outputs land in heads_scr ----
    # Static lane slices only; results are stored, not carried, so live ranges
    # stay bounded per head.
    for h in range(H):
        lo, hi = h * Dh, (h + 1) * Dh
        qh = q[:, lo:hi]                                                  # (tq, Dh)
        kh = k[:, lo:hi]                                                  # (S, Dh)
        vh = v[:, lo:hi]                                                  # (S, Dh)
        s = jax.lax.dot_general(
            qh, kh, dimension_numbers=(((1,), (1,)), ((), ())),
            preferred_element_type=jnp.float32) * scale + bias           # (tq, S)
        s = s - jnp.max(s, axis=-1, keepdims=True)
        p = jnp.exp(s)
        p = p * pl.reciprocal(jnp.sum(p, axis=-1, keepdims=True), approx=True)
        heads_scr[:, lo:hi] = jnp.dot(
            p.astype(jnp.bfloat16), vh,
            preferred_element_type=jnp.float32).astype(jnp.bfloat16)

    # ---- single full-K output projection ----
    attn = jnp.dot(heads_scr[...], wo_ref[...],
                   preferred_element_type=jnp.float32) + bo_ref[...]      # (tq, D)

    # dropout(p=0.1) -> identity (inference); shared LayerNorm params
    h1 = _layer_norm(xq + attn, gamma_ref[...], beta_ref[...])            # (tq, D)

    # ---- feed-forward sublayer, tiled over the same query tile ----
    h1b = h1.astype(jnp.bfloat16)
    hid = jnp.dot(h1b, w1_ref[...], preferred_element_type=jnp.float32) + b1_ref[...]
    hid = jnp.maximum(hid, jnp.float32(0.0))                              # relu
    y2 = jnp.dot(hid.astype(jnp.bfloat16), w2_ref[...],
                 preferred_element_type=jnp.float32) + b2_ref[...]

    # dropout(p=0.1) -> identity (inference)
    o_ref[0] = _layer_norm(h1 + y2, gamma_ref[...], beta_ref[...]).astype(o_ref.dtype)


# ----------------------------- Wrapper -------------------------------------- #

def _const_spec(shape):
    """Constant-index (weight) spec; single-buffered to halve resident VMEM."""
    nd = len(shape)
    idx = lambda b, q, _nd=nd: (0,) * _nd
    try:
        return pl.BlockSpec(shape, idx, pipeline_mode=pl.Buffered(1))
    except (AttributeError, TypeError):
        return pl.BlockSpec(shape, idx)


def _pick_tq(S, max_tq=256):
    if S <= max_tq:
        return S
    for tq in range(max_tq, 7, -1):
        if S % tq == 0 and tq % 8 == 0:
            return tq
    return S


def _vmem_limit_bytes():
    try:
        cap = pltpu.get_tpu_info().vmem_capacity_bytes
    except Exception:
        cap = 64 << 20
    return min(int(cap * 0.85), 100 << 20)


def transformer_encoder_forward(x, pad_mask, params, num_heads):
    """x: (B, S, D) f32, pad_mask: (B, 1, S) f32 (1.0 = padded)."""
    B, S, D = x.shape
    H = num_heads
    assert D % H == 0, "embedding_dim must be divisible by num_heads"
    Dff = params["w1"].shape[1]
    bf = jnp.bfloat16

    tq = _pick_tq(S)
    n_qt = S // tq

    # Host-side weight prep: bf16 weights, fused K/V projection, lane-dense biases.
    wq = params["wq"].astype(bf)                                            # (D, D)
    wkv = jnp.concatenate([params["wk"], params["wv"]], axis=1).astype(bf)  # (D, 2D)
    bkv = jnp.concatenate([params["bk"], params["bv"]], axis=1)             # (1, 2D)
    wo = params["wo"].astype(bf)                                            # (D, D)
    w1 = params["w1"].astype(bf)                                            # (D, Dff)
    w2 = params["w2"].astype(bf)                                            # (Dff, D)

    xq_spec = pl.BlockSpec((1, tq, D), lambda b, q: (b, q, 0))   # query tile
    xs_spec = pl.BlockSpec((1, S, D), lambda b, q: (b, 0, 0))    # full seq (for K/V)
    m_spec = pl.BlockSpec((1, 1, S), lambda b, q: (b, 0, 0))

    flops = 2 * B * S * (4 * D * D + 2 * S * D + 2 * D * Dff)
    transcendentals = B * H * S * S
    bytes_accessed = (2 * B * S * D + B * S) * 4 + (4 * D * D + 2 * D * Dff) * 2

    out = pl.pallas_call(
        functools.partial(encoder_layer_kernel, num_heads=H),
        out_shape=jax.ShapeDtypeStruct((B, S, D), x.dtype),
        grid=(B, n_qt),
        in_specs=[
            xq_spec, xs_spec, m_spec,
            _const_spec((D, D)), _const_spec((1, D)),        # Wq, bq
            _const_spec((D, 2 * D)), _const_spec((1, 2 * D)),  # Wkv, bkv (fused)
            _const_spec((D, D)), _const_spec((1, D)),        # Wo, bo
            _const_spec((D, Dff)), _const_spec((1, Dff)),    # W1, b1
            _const_spec((Dff, D)), _const_spec((1, D)),      # W2, b2
            _const_spec((1, D)), _const_spec((1, D)),        # gamma, beta (shared LN)
        ],
        out_specs=pl.BlockSpec((1, tq, D), lambda b, q: (b, q, 0)),
        scratch_shapes=[
            pltpu.VMEM((S, D), bf),    # K (full sequence, persists across q-tiles)
            pltpu.VMEM((S, D), bf),    # V
            pltpu.VMEM((tq, D), bf),   # per-head outputs (concat layout)
        ],
        compiler_params=pltpu.CompilerParams(
            dimension_semantics=("parallel", "arbitrary"),
            vmem_limit_bytes=_vmem_limit_bytes()),
        cost_estimate=pl.CostEstimate(flops=flops,
                                      transcendentals=transcendentals,
                                      bytes_accessed=bytes_accessed),
    )(x, x, pad_mask,
      wq, params["bq"], wkv, bkv, wo, params["bo"],
      w1, params["b1"], w2, params["b2"],
      params["ln_gamma"], params["ln_beta"])
    return out


def init_params(key, D, num_heads):
    """Deterministic synthetic parameters matching the module's __init__ shapes."""
    Dff = 4 * D
    keys = jax.random.split(key, 8)
    s = 0.02

    def w(k, shape):
        return (s * jax.random.normal(k, shape)).astype(jnp.float32)

    return {
        # MultiHeadAttention: q/k/v/out projections (embedding_dim x embedding_dim)
        "wq": w(keys[0], (D, D)), "bq": jnp.zeros((1, D), jnp.float32),
        "wk": w(keys[1], (D, D)), "bk": jnp.zeros((1, D), jnp.float32),
        "wv": w(keys[2], (D, D)), "bv": jnp.zeros((1, D), jnp.float32),
        "wo": w(keys[3], (D, D)), "bo": jnp.zeros((1, D), jnp.float32),
        # shared LayerNorm(embedding_dim) — module uses ONE LayerNorm for both sublayers
        "ln_gamma": jnp.ones((1, D), jnp.float32),
        "ln_beta": jnp.zeros((1, D), jnp.float32),
        # input_feed_forward: D -> 4D ; output_feed_forward: 4D -> D
        "w1": w(keys[4], (D, Dff)), "b1": jnp.zeros((1, Dff), jnp.float32),
        "w2": w(keys[5], (Dff, D)), "b2": jnp.zeros((1, D), jnp.float32),
    }


if __name__ == "__main__":
    B, S, D, H = 2, 8, 32, 4

    key = jax.random.PRNGKey(0)
    k_x, k_p = jax.random.split(key)

    x = jax.random.normal(k_x, (B, S, D), dtype=jnp.float32)

    # padding mask: (B, 1, S) float, 1.0 = padded key position
    pad = jnp.zeros((B, 1, S), jnp.float32)
    pad = pad.at[1, 0, -2:].set(1.0)   # pad last two positions of batch 1

    params = init_params(k_p, D, H)

    out = transformer_encoder_forward(x, pad, params, num_heads=H)
    out = jax.block_until_ready(out)

    assert out.shape == (B, S, D) and out.dtype == jnp.float32
    assert bool(jnp.all(jnp.isfinite(out)))
    print("KERNEL_OK")
</pallas_src>

<mosaic_0001>
module attributes {stable_mosaic.version = 11 : i64} {
  func.func @encoder_layer_kernel(%arg0: i32, %arg1: i32, %arg2: memref<1x8x32xf32, #tpu.memory_space<vmem>>, %arg3: memref<1x8x32xf32, #tpu.memory_space<vmem>>, %arg4: memref<1x1x8xf32, #tpu.memory_space<vmem>>, %arg5: memref<32x32xbf16, #tpu.memory_space<vmem>>, %arg6: memref<1x32xf32, #tpu.memory_space<vmem>>, %arg7: memref<32x64xbf16, #tpu.memory_space<vmem>>, %arg8: memref<1x64xf32, #tpu.memory_space<vmem>>, %arg9: memref<32x32xbf16, #tpu.memory_space<vmem>>, %arg10: memref<1x32xf32, #tpu.memory_space<vmem>>, %arg11: memref<32x128xbf16, #tpu.memory_space<vmem>>, %arg12: memref<1x128xf32, #tpu.memory_space<vmem>>, %arg13: memref<128x32xbf16, #tpu.memory_space<vmem>>, %arg14: memref<1x32xf32, #tpu.memory_space<vmem>>, %arg15: memref<1x32xf32, #tpu.memory_space<vmem>>, %arg16: memref<1x32xf32, #tpu.memory_space<vmem>>, %arg17: memref<1x8x32xf32, #tpu.memory_space<vmem>>, %arg18: memref<8x32xbf16, #tpu.memory_space<vmem>>, %arg19: memref<8x32xbf16, #tpu.memory_space<vmem>>, %arg20: memref<8x32xbf16, #tpu.memory_space<vmem>>) attributes {dimension_semantics = [#tpu.dimension_semantics<parallel>, #tpu.dimension_semantics<arbitrary>], iteration_bounds = array<i64: 2, 1>, scalar_prefetch = 0 : i64, scratch_operands = 3 : i64, tpu.core_type = #tpu.core_type<tc>, window_params = [{transform_indices = @transform_0, window_bounds = array<i64: 1, 8, 32>}, {transform_indices = @transform_1, window_bounds = array<i64: 1, 8, 32>}, {transform_indices = @transform_2, window_bounds = array<i64: 1, 1, 8>}, {pipeline_mode = #tpu.pipeline_mode<synchronous>, transform_indices = @transform_3, window_bounds = array<i64: 32, 32>}, {pipeline_mode = #tpu.pipeline_mode<synchronous>, transform_indices = @transform_4, window_bounds = array<i64: 1, 32>}, {pipeline_mode = #tpu.pipeline_mode<synchronous>, transform_indices = @transform_5, window_bounds = array<i64: 32, 64>}, {pipeline_mode = #tpu.pipeline_mode<synchronous>, transform_indices = @transform_6, window_bounds = array<i64: 1, 64>}, {pipeline_mode = #tpu.pipeline_mode<synchronous>, transform_indices = @transform_7, window_bounds = array<i64: 32, 32>}, {pipeline_mode = #tpu.pipeline_mode<synchronous>, transform_indices = @transform_8, window_bounds = array<i64: 1, 32>}, {pipeline_mode = #tpu.pipeline_mode<synchronous>, transform_indices = @transform_9, window_bounds = array<i64: 32, 128>}, {pipeline_mode = #tpu.pipeline_mode<synchronous>, transform_indices = @transform_10, window_bounds = array<i64: 1, 128>}, {pipeline_mode = #tpu.pipeline_mode<synchronous>, transform_indices = @transform_11, window_bounds = array<i64: 128, 32>}, {pipeline_mode = #tpu.pipeline_mode<synchronous>, transform_indices = @transform_12, window_bounds = array<i64: 1, 32>}, {pipeline_mode = #tpu.pipeline_mode<synchronous>, transform_indices = @transform_13, window_bounds = array<i64: 1, 32>}, {pipeline_mode = #tpu.pipeline_mode<synchronous>, transform_indices = @transform_14, window_bounds = array<i64: 1, 32>}, {transform_indices = @transform_15, window_bounds = array<i64: 1, 8, 32>}]} {
    %c0_i32 = arith.constant 0 : i32
    %0 = arith.cmpi eq, %arg1, %c0_i32 : i32
    %1 = arith.extui %0 : i1 to i32
    %c0_i32_0 = arith.constant 0 : i32
    %2 = arith.cmpi ne, %1, %c0_i32_0 : i32
    scf.if %2 {
      %c0_77 = arith.constant 0 : index
      %c0_78 = arith.constant 0 : index
      %c0_79 = arith.constant 0 : index
      %181 = vector.load %arg3[%c0_77, %c0_78, %c0_79] : memref<1x8x32xf32, #tpu.memory_space<vmem>>, vector<1x8x32xf32>
      %182 = vector.shape_cast %181 : vector<1x8x32xf32> to vector<8x32xf32>
      %183 = arith.truncf %182 : vector<8x32xf32> to vector<8x32xbf16>
      %c0_80 = arith.constant 0 : index
      %c0_81 = arith.constant 0 : index
      %184 = vector.load %arg7[%c0_80, %c0_81] : memref<32x64xbf16, #tpu.memory_space<vmem>>, vector<32x64xbf16>
      %cst_82 = arith.constant dense<0.000000e+00> : vector<8x64xf32>
      %185 = tpu.matmul %183, %184, %cst_82 {dimension_numbers = #tpu.dot_dimension_numbers<[1], [0], [0], [1], [0, 0, 1, 1], [], []>} : vector<8x32xbf16>, vector<32x64xbf16>, vector<8x64xf32> -> vector<8x64xf32>
      %c0_83 = arith.constant 0 : index
      %c0_84 = arith.constant 0 : index
      %186 = vector.load %arg8[%c0_83, %c0_84] : memref<1x64xf32, #tpu.memory_space<vmem>>, vector<1x64xf32>
      %187 = vector.broadcast %186 : vector<1x64xf32> to vector<8x64xf32>
      %188 = arith.addf %185, %187 : vector<8x64xf32>
      %189 = vector.extract_strided_slice %188 {offsets = [0, 0], sizes = [8, 32], strides = [1, 1]} : vector<8x64xf32> to vector<8x32xf32>
      %190 = arith.truncf %189 : vector<8x32xf32> to vector<8x32xbf16>
      %c0_85 = arith.constant 0 : index
      %c0_86 = arith.constant 0 : index
      %191 = vector.load %arg18[%c0_85, %c0_86] : memref<8x32xbf16, #tpu.memory_space<vmem>>, vector<8x32xbf16>
      tpu.vector_store %arg18[%c0_85, %c0_86], %190 {strides = array<i32>} : memref<8x32xbf16, #tpu.memory_space<vmem>>, vector<8x32xbf16>,
      %192 = vector.extract_strided_slice %188 {offsets = [0, 32], sizes = [8, 32], strides = [1, 1]} : vector<8x64xf32> to vector<8x32xf32>
      %193 = arith.truncf %192 : vector<8x32xf32> to vector<8x32xbf16>
      %c0_87 = arith.constant 0 : index
      %c0_88 = arith.constant 0 : index
      %194 = vector.load %arg19[%c0_87, %c0_88] : memref<8x32xbf16, #tpu.memory_space<vmem>>, vector<8x32xbf16>
      tpu.vector_store %arg19[%c0_87, %c0_88], %193 {strides = array<i32>} : memref<8x32xbf16, #tpu.memory_space<vmem>>, vector<8x32xbf16>,
    } else {
    }
    %c0 = arith.constant 0 : index
    %c0_1 = arith.constant 0 : index
    %c0_2 = arith.constant 0 : index
    %3 = vector.load %arg2[%c0, %c0_1, %c0_2] : memref<1x8x32xf32, #tpu.memory_space<vmem>>, vector<1x8x32xf32>
    %4 = vector.shape_cast %3 : vector<1x8x32xf32> to vector<8x32xf32>
    %5 = arith.truncf %4 : vector<8x32xf32> to vector<8x32xbf16>
    %c0_3 = arith.constant 0 : index
    %c0_4 = arith.constant 0 : index
    %6 = vector.load %arg5[%c0_3, %c0_4] : memref<32x32xbf16, #tpu.memory_space<vmem>>, vector<32x32xbf16>
    %cst = arith.constant dense<0.000000e+00> : vector<8x32xf32>
    %7 = tpu.matmul %5, %6, %cst {dimension_numbers = #tpu.dot_dimension_numbers<[1], [0], [0], [1], [0, 0, 1, 1], [], []>} : vector<8x32xbf16>, vector<32x32xbf16>, vector<8x32xf32> -> vector<8x32xf32>
    %c0_5 = arith.constant 0 : index
    %c0_6 = arith.constant 0 : index
    %8 = vector.load %arg6[%c0_5, %c0_6] : memref<1x32xf32, #tpu.memory_space<vmem>>, vector<1x32xf32>
    %9 = vector.broadcast %8 : vector<1x32xf32> to vector<8x32xf32>
    %10 = arith.addf %7, %9 : vector<8x32xf32>
    %11 = arith.truncf %10 : vector<8x32xf32> to vector<8x32xbf16>
    %c0_7 = arith.constant 0 : index
    %c0_8 = arith.constant 0 : index
    %c0_9 = arith.constant 0 : index
    %12 = vector.load %arg4[%c0_7, %c0_8, %c0_9] : memref<1x1x8xf32, #tpu.memory_space<vmem>>, vector<1x1x8xf32>
    %13 = vector.shape_cast %12 : vector<1x1x8xf32> to vector<1x8xf32>
    %cst_10 = arith.constant -1.000000e+09 : f32
    %14 = vector.broadcast %cst_10 : f32 to vector<1x8xf32>
    %15 = arith.mulf %13, %14 : vector<1x8xf32>
    %cst_11 = arith.constant 8.000000e+00 : f32
    %16 = math.sqrt %cst_11 : f32
    %cst_12 = arith.constant 1.000000e+00 : f32
    %17 = arith.divf %cst_12, %16 : f32
    %c0_13 = arith.constant 0 : index
    %c0_14 = arith.constant 0 : index
    %18 = vector.load %arg18[%c0_13, %c0_14] : memref<8x32xbf16, #tpu.memory_space<vmem>>, vector<8x32xbf16>
    %c0_15 = arith.constant 0 : index
    %c0_16 = arith.constant 0 : index
    %19 = vector.load %arg19[%c0_15, %c0_16] : memref<8x32xbf16, #tpu.memory_space<vmem>>, vector<8x32xbf16>
    %20 = vector.extract_strided_slice %11 {offsets = [0, 0], sizes = [8, 8], strides = [1, 1]} : vector<8x32xbf16> to vector<8x8xbf16>
    %21 = vector.extract_strided_slice %18 {offsets = [0, 0], sizes = [8, 8], strides = [1, 1]} : vector<8x32xbf16> to vector<8x8xbf16>
    %22 = vector.extract_strided_slice %19 {offsets = [0, 0], sizes = [8, 8], strides = [1, 1]} : vector<8x32xbf16> to vector<8x8xbf16>
    %cst_17 = arith.constant dense<0.000000e+00> : vector<8x8xf32>
    %23 = tpu.matmul %20, %21, %cst_17 {dimension_numbers = #tpu.dot_dimension_numbers<[1], [1], [0], [0], [0, 0, 1, 0], [], []>} : vector<8x8xbf16>, vector<8x8xbf16>, vector<8x8xf32> -> vector<8x8xf32>
    %24 = vector.broadcast %17 : f32 to vector<8x8xf32>
    %25 = arith.mulf %23, %24 : vector<8x8xf32>
    %26 = vector.broadcast %15 : vector<1x8xf32> to vector<8x8xf32>
    %27 = arith.addf %25, %26 : vector<8x8xf32>
    %cst_18 = arith.constant dense<0xFF800000> : vector<8xf32>
    %28 = vector.multi_reduction <maximumf>, %27, %cst_18 [1] : vector<8x8xf32> to vector<8xf32>
    %29 = vector.shape_cast %28 : vector<8xf32> to vector<8x1xf32>
    %30 = vector.broadcast %29 : vector<8x1xf32> to vector<8x8xf32>
    %31 = arith.subf %27, %30 : vector<8x8xf32>
    %32 = math.exp %31 : vector<8x8xf32>
    %cst_19 = arith.constant dense<0.000000e+00> : vector<8xf32>
    %33 = vector.multi_reduction <add>, %32, %cst_19 [1] : vector<8x8xf32> to vector<8xf32>
    %34 = vector.shape_cast %33 : vector<8xf32> to vector<8x1xf32>
    %35 = tpu.reciprocal %34 {approx = true} : vector<8x1xf32> -> vector<8x1xf32>
    %36 = vector.broadcast %35 : vector<8x1xf32> to vector<8x8xf32>
    %37 = arith.mulf %32, %36 : vector<8x8xf32>
    %38 = arith.truncf %37 : vector<8x8xf32> to vector<8x8xbf16>
    %cst_20 = arith.constant dense<0.000000e+00> : vector<8x8xf32>
    %39 = tpu.matmul %38, %22, %cst_20 {dimension_numbers = #tpu.dot_dimension_numbers<[1], [0], [0], [1], [0, 0, 1, 1], [], []>} : vector<8x8xbf16>, vector<8x8xbf16>, vector<8x8xf32> -> vector<8x8xf32>
    %40 = arith.truncf %39 : vector<8x8xf32> to vector<8x8xbf16>
    %c0_21 = arith.constant 0 : index
    %c0_22 = arith.constant 0 : index
    %41 = vector.load %arg20[%c0_21, %c0_22] : memref<8x32xbf16, #tpu.memory_space<vmem>>, vector<8x8xbf16>
    tpu.vector_store %arg20[%c0_21, %c0_22], %40 {strides = array<i32>} : memref<8x32xbf16, #tpu.memory_space<vmem>>, vector<8x8xbf16>,
    %42 = vector.extract_strided_slice %11 {offsets = [0, 8], sizes = [8, 8], strides = [1, 1]} : vector<8x32xbf16> to vector<8x8xbf16>
    %43 = vector.extract_strided_slice %18 {offsets = [0, 8], sizes = [8, 8], strides = [1, 1]} : vector<8x32xbf16> to vector<8x8xbf16>
    %44 = vector.extract_strided_slice %19 {offsets = [0, 8], sizes = [8, 8], strides = [1, 1]} : vector<8x32xbf16> to vector<8x8xbf16>
    %cst_23 = arith.constant dense<0.000000e+00> : vector<8x8xf32>
    %45 = tpu.matmul %42, %43, %cst_23 {dimension_numbers = #tpu.dot_dimension_numbers<[1], [1], [0], [0], [0, 0, 1, 0], [], []>} : vector<8x8xbf16>, vector<8x8xbf16>, vector<8x8xf32> -> vector<8x8xf32>
    %46 = vector.broadcast %17 : f32 to vector<8x8xf32>
    %47 = arith.mulf %45, %46 : vector<8x8xf32>
    %48 = vector.broadcast %15 : vector<1x8xf32> to vector<8x8xf32>
    %49 = arith.addf %47, %48 : vector<8x8xf32>
    %cst_24 = arith.constant dense<0xFF800000> : vector<8xf32>
    %50 = vector.multi_reduction <maximumf>, %49, %cst_24 [1] : vector<8x8xf32> to vector<8xf32>
    %51 = vector.shape_cast %50 : vector<8xf32> to vector<8x1xf32>
    %52 = vector.broadcast %51 : vector<8x1xf32> to vector<8x8xf32>
    %53 = arith.subf %49, %52 : vector<8x8xf32>
    %54 = math.exp %53 : vector<8x8xf32>
    %cst_25 = arith.constant dense<0.000000e+00> : vector<8xf32>
    %55 = vector.multi_reduction <add>, %54, %cst_25 [1] : vector<8x8xf32> to vector<8xf32>
    %56 = vector.shape_cast %55 : vector<8xf32> to vector<8x1xf32>
    %57 = tpu.reciprocal %56 {approx = true} : vector<8x1xf32> -> vector<8x1xf32>
    %58 = vector.broadcast %57 : vector<8x1xf32> to vector<8x8xf32>
    %59 = arith.mulf %54, %58 : vector<8x8xf32>
    %60 = arith.truncf %59 : vector<8x8xf32> to vector<8x8xbf16>
    %cst_26 = arith.constant dense<0.000000e+00> : vector<8x8xf32>
    %61 = tpu.matmul %60, %44, %cst_26 {dimension_numbers = #tpu.dot_dimension_numbers<[1], [0], [0], [1], [0, 0, 1, 1], [], []>} : vector<8x8xbf16>, vector<8x8xbf16>, vector<8x8xf32> -> vector<8x8xf32>
    %62 = arith.truncf %61 : vector<8x8xf32> to vector<8x8xbf16>
    %c0_27 = arith.constant 0 : index
    %c8 = arith.constant 8 : index
    %63 = vector.load %arg20[%c0_27, %c8] : memref<8x32xbf16, #tpu.memory_space<vmem>>, vector<8x8xbf16>
    tpu.vector_store %arg20[%c0_27, %c8], %62 {strides = array<i32>} : memref<8x32xbf16, #tpu.memory_space<vmem>>, vector<8x8xbf16>,
    %64 = vector.extract_strided_slice %11 {offsets = [0, 16], sizes = [8, 8], strides = [1, 1]} : vector<8x32xbf16> to vector<8x8xbf16>
    %65 = vector.extract_strided_slice %18 {offsets = [0, 16], sizes = [8, 8], strides = [1, 1]} : vector<8x32xbf16> to vector<8x8xbf16>
    %66 = vector.extract_strided_slice %19 {offsets = [0, 16], sizes = [8, 8], strides = [1, 1]} : vector<8x32xbf16> to vector<8x8xbf16>
    %cst_28 = arith.constant dense<0.000000e+00> : vector<8x8xf32>
    %67 = tpu.matmul %64, %65, %cst_28 {dimension_numbers = #tpu.dot_dimension_numbers<[1], [1], [0], [0], [0, 0, 1, 0], [], []>} : vector<8x8xbf16>, vector<8x8xbf16>, vector<8x8xf32> -> vector<8x8xf32>
    %68 = vector.broadcast %17 : f32 to vector<8x8xf32>
    %69 = arith.mulf %67, %68 : vector<8x8xf32>
    %70 = vector.broadcast %15 : vector<1x8xf32> to vector<8x8xf32>
    %71 = arith.addf %69, %70 : vector<8x8xf32>
    %cst_29 = arith.constant dense<0xFF800000> : vector<8xf32>
    %72 = vector.multi_reduction <maximumf>, %71, %cst_29 [1] : vector<8x8xf32> to vector<8xf32>
    %73 = vector.shape_cast %72 : vector<8xf32> to vector<8x1xf32>
    %74 = vector.broadcast %73 : vector<8x1xf32> to vector<8x8xf32>
    %75 = arith.subf %71, %74 : vector<8x8xf32>
    %76 = math.exp %75 : vector<8x8xf32>
    %cst_30 = arith.constant dense<0.000000e+00> : vector<8xf32>
    %77 = vector.multi_reduction <add>, %76, %cst_30 [1] : vector<8x8xf32> to vector<8xf32>
    %78 = vector.shape_cast %77 : vector<8xf32> to vector<8x1xf32>
    %79 = tpu.reciprocal %78 {approx = true} : vector<8x1xf32> -> vector<8x1xf32>
    %80 = vector.broadcast %79 : vector<8x1xf32> to vector<8x8xf32>
    %81 = arith.mulf %76, %80 : vector<8x8xf32>
    %82 = arith.truncf %81 : vector<8x8xf32> to vector<8x8xbf16>
    %cst_31 = arith.constant dense<0.000000e+00> : vector<8x8xf32>
    %83 = tpu.matmul %82, %66, %cst_31 {dimension_numbers = #tpu.dot_dimension_numbers<[1], [0], [0], [1], [0, 0, 1, 1], [], []>} : vector<8x8xbf16>, vector<8x8xbf16>, vector<8x8xf32> -> vector<8x8xf32>
    %84 = arith.truncf %83 : vector<8x8xf32> to vector<8x8xbf16>
    %c0_32 = arith.constant 0 : index
    %c16 = arith.constant 16 : index
    %85 = vector.load %arg20[%c0_32, %c16] : memref<8x32xbf16, #tpu.memory_space<vmem>>, vector<8x8xbf16>
    tpu.vector_store %arg20[%c0_32, %c16], %84 {strides = array<i32>} : memref<8x32xbf16, #tpu.memory_space<vmem>>, vector<8x8xbf16>,
    %86 = vector.extract_strided_slice %11 {offsets = [0, 24], sizes = [8, 8], strides = [1, 1]} : vector<8x32xbf16> to vector<8x8xbf16>
    %87 = vector.extract_strided_slice %18 {offsets = [0, 24], sizes = [8, 8], strides = [1, 1]} : vector<8x32xbf16> to vector<8x8xbf16>
    %88 = vector.extract_strided_slice %19 {offsets = [0, 24], sizes = [8, 8], strides = [1, 1]} : vector<8x32xbf16> to vector<8x8xbf16>
    %cst_33 = arith.constant dense<0.000000e+00> : vector<8x8xf32>
    %89 = tpu.matmul %86, %87, %cst_33 {dimension_numbers = #tpu.dot_dimension_numbers<[1], [1], [0], [0], [0, 0, 1, 0], [], []>} : vector<8x8xbf16>, vector<8x8xbf16>, vector<8x8xf32> -> vector<8x8xf32>
    %90 = vector.broadcast %17 : f32 to vector<8x8xf32>
    %91 = arith.mulf %89, %90 : vector<8x8xf32>
    %92 = vector.broadcast %15 : vector<1x8xf32> to vector<8x8xf32>
    %93 = arith.addf %91, %92 : vector<8x8xf32>
    %cst_34 = arith.constant dense<0xFF800000> : vector<8xf32>
    %94 = vector.multi_reduction <maximumf>, %93, %cst_34 [1] : vector<8x8xf32> to vector<8xf32>
    %95 = vector.shape_cast %94 : vector<8xf32> to vector<8x1xf32>
    %96 = vector.broadcast %95 : vector<8x1xf32> to vector<8x8xf32>
    %97 = arith.subf %93, %96 : vector<8x8xf32>
    %98 = math.exp %97 : vector<8x8xf32>
    %cst_35 = arith.constant dense<0.000000e+00> : vector<8xf32>
    %99 = vector.multi_reduction <add>, %98, %cst_35 [1] : vector<8x8xf32> to vector<8xf32>
    %100 = vector.shape_cast %99 : vector<8xf32> to vector<8x1xf32>
    %101 = tpu.reciprocal %100 {approx = true} : vector<8x1xf32> -> vector<8x1xf32>
    %102 = vector.broadcast %101 : vector<8x1xf32> to vector<8x8xf32>
    %103 = arith.mulf %98, %102 : vector<8x8xf32>
    %104 = arith.truncf %103 : vector<8x8xf32> to vector<8x8xbf16>
    %cst_36 = arith.constant dense<0.000000e+00> : vector<8x8xf32>
    %105 = tpu.matmul %104, %88, %cst_36 {dimension_numbers = #tpu.dot_dimension_numbers<[1], [0], [0], [1], [0, 0, 1, 1], [], []>} : vector<8x8xbf16>, vector<8x8xbf16>, vector<8x8xf32> -> vector<8x8xf32>
    %106 = arith.truncf %105 : vector<8x8xf32> to vector<8x8xbf16>
    %c0_37 = arith.constant 0 : index
    %c24 = arith.constant 24 : index
    %107 = vector.load %arg20[%c0_37, %c24] : memref<8x32xbf16, #tpu.memory_space<vmem>>, vector<8x8xbf16>
    tpu.vector_store %arg20[%c0_37, %c24], %106 {strides = array<i32>} : memref<8x32xbf16, #tpu.memory_space<vmem>>, vector<8x8xbf16>,
    %c0_38 = arith.constant 0 : index
    %c0_39 = arith.constant 0 : index
    %108 = vector.load %arg20[%c0_38, %c0_39] : memref<8x32xbf16, #tpu.memory_space<vmem>>, vector<8x32xbf16>
    %c0_40 = arith.constant 0 : index
    %c0_41 = arith.constant 0 : index
    %109 = vector.load %arg9[%c0_40, %c0_41] : memref<32x32xbf16, #tpu.memory_space<vmem>>, vector<32x32xbf16>
    %cst_42 = arith.constant dense<0.000000e+00> : vector<8x32xf32>
    %110 = tpu.matmul %108, %109, %cst_42 {dimension_numbers = #tpu.dot_dimension_numbers<[1], [0], [0], [1], [0, 0, 1, 1], [], []>} : vector<8x32xbf16>, vector<32x32xbf16>, vector<8x32xf32> -> vector<8x32xf32>
    %c0_43 = arith.constant 0 : index
    %c0_44 = arith.constant 0 : index
    %111 = vector.load %arg10[%c0_43, %c0_44] : memref<1x32xf32, #tpu.memory_space<vmem>>, vector<1x32xf32>
    %112 = vector.broadcast %111 : vector<1x32xf32> to vector<8x32xf32>
    %113 = arith.addf %110, %112 : vector<8x32xf32>
    %114 = arith.addf %4, %113 : vector<8x32xf32>
    %c0_45 = arith.constant 0 : index
    %c0_46 = arith.constant 0 : index
    %115 = vector.load %arg15[%c0_45, %c0_46] : memref<1x32xf32, #tpu.memory_space<vmem>>, vector<1x32xf32>
    %c0_47 = arith.constant 0 : index
    %c0_48 = arith.constant 0 : index
    %116 = vector.load %arg16[%c0_47, %c0_48] : memref<1x32xf32, #tpu.memory_space<vmem>>, vector<1x32xf32>
    %cst_49 = arith.constant dense<0.000000e+00> : vector<8xf32>
    %117 = vector.multi_reduction <add>, %114, %cst_49 [1] : vector<8x32xf32> to vector<8xf32>
    %118 = vector.shape_cast %117 : vector<8xf32> to vector<8x1xf32>
    %cst_50 = arith.constant 3.200000e+01 : f32
    %119 = vector.broadcast %cst_50 : f32 to vector<8x1xf32>
    %120 = arith.divf %118, %119 : vector<8x1xf32>
    %121 = vector.broadcast %120 : vector<8x1xf32> to vector<8x32xf32>
    %122 = arith.subf %114, %121 : vector<8x32xf32>
    %123 = arith.mulf %122, %122 : vector<8x32xf32>
    %cst_51 = arith.constant dense<0.000000e+00> : vector<8xf32>
    %124 = vector.multi_reduction <add>, %123, %cst_51 [1] : vector<8x32xf32> to vector<8xf32>
    %125 = vector.shape_cast %124 : vector<8xf32> to vector<8x1xf32>
    %cst_52 = arith.constant 3.200000e+01 : f32
    %126 = vector.broadcast %cst_52 : f32 to vector<8x1xf32>
    %127 = arith.divf %125, %126 : vector<8x1xf32>
    %128 = vector.broadcast %120 : vector<8x1xf32> to vector<8x32xf32>
    %129 = arith.subf %114, %128 : vector<8x32xf32>
    %cst_53 = arith.constant 9.99999974E-6 : f32
    %130 = vector.broadcast %cst_53 : f32 to vector<8x1xf32>
    %131 = arith.addf %127, %130 : vector<8x1xf32>
    %132 = math.rsqrt %131 : vector<8x1xf32>
    %133 = vector.broadcast %132 : vector<8x1xf32> to vector<8x32xf32>
    %134 = arith.mulf %129, %133 : vector<8x32xf32>
    %135 = vector.broadcast %115 : vector<1x32xf32> to vector<8x32xf32>
    %136 = arith.mulf %134, %135 : vector<8x32xf32>
    %137 = vector.broadcast %116 : vector<1x32xf32> to vector<8x32xf32>
    %138 = arith.addf %136, %137 : vector<8x32xf32>
    %139 = arith.truncf %138 : vector<8x32xf32> to vector<8x32xbf16>
    %c0_54 = arith.constant 0 : index
    %c0_55 = arith.constant 0 : index
    %140 = vector.load %arg11[%c0_54, %c0_55] : memref<32x128xbf16, #tpu.memory_space<vmem>>, vector<32x128xbf16>
    %cst_56 = arith.constant dense<0.000000e+00> : vector<8x128xf32>
    %141 = tpu.matmul %139, %140, %cst_56 {dimension_numbers = #tpu.dot_dimension_numbers<[1], [0], [0], [1], [0, 0, 1, 1], [], []>} : vector<8x32xbf16>, vector<32x128xbf16>, vector<8x128xf32> -> vector<8x128xf32>
    %c0_57 = arith.constant 0 : index
    %c0_58 = arith.constant 0 : index
    %142 = vector.load %arg12[%c0_57, %c0_58] : memref<1x128xf32, #tpu.memory_space<vmem>>, vector<1x128xf32>
    %143 = vector.broadcast %142 : vector<1x128xf32> to vector<8x128xf32>
    %144 = arith.addf %141, %143 : vector<8x128xf32>
    %cst_59 = arith.constant 0.000000e+00 : f32
    %145 = vector.broadcast %cst_59 : f32 to vector<8x128xf32>
    %146 = arith.maximumf %144, %145 : vector<8x128xf32>
    %147 = arith.truncf %146 : vector<8x128xf32> to vector<8x128xbf16>
    %c0_60 = arith.constant 0 : index
    %c0_61 = arith.constant 0 : index
    %148 = vector.load %arg13[%c0_60, %c0_61] : memref<128x32xbf16, #tpu.memory_space<vmem>>, vector<128x32xbf16>
    %cst_62 = arith.constant dense<0.000000e+00> : vector<8x32xf32>
    %149 = tpu.matmul %147, %148, %cst_62 {dimension_numbers = #tpu.dot_dimension_numbers<[1], [0], [0], [1], [0, 0, 1, 1], [], []>} : vector<8x128xbf16>, vector<128x32xbf16>, vector<8x32xf32> -> vector<8x32xf32>
    %c0_63 = arith.constant 0 : index
    %c0_64 = arith.constant 0 : index
    %150 = vector.load %arg14[%c0_63, %c0_64] : memref<1x32xf32, #tpu.memory_space<vmem>>, vector<1x32xf32>
    %151 = vector.broadcast %150 : vector<1x32xf32> to vector<8x32xf32>
    %152 = arith.addf %149, %151 : vector<8x32xf32>
    %153 = arith.addf %138, %152 : vector<8x32xf32>
    %c0_65 = arith.constant 0 : index
    %c0_66 = arith.constant 0 : index
    %154 = vector.load %arg15[%c0_65, %c0_66] : memref<1x32xf32, #tpu.memory_space<vmem>>, vector<1x32xf32>
    %c0_67 = arith.constant 0 : index
    %c0_68 = arith.constant 0 : index
    %155 = vector.load %arg16[%c0_67, %c0_68] : memref<1x32xf32, #tpu.memory_space<vmem>>, vector<1x32xf32>
    %cst_69 = arith.constant dense<0.000000e+00> : vector<8xf32>
    %156 = vector.multi_reduction <add>, %153, %cst_69 [1] : vector<8x32xf32> to vector<8xf32>
    %157 = vector.shape_cast %156 : vector<8xf32> to vector<8x1xf32>
    %cst_70 = arith.constant 3.200000e+01 : f32
    %158 = vector.broadcast %cst_70 : f32 to vector<8x1xf32>
    %159 = arith.divf %157, %158 : vector<8x1xf32>
    %160 = vector.broadcast %159 : vector<8x1xf32> to vector<8x32xf32>
    %161 = arith.subf %153, %160 : vector<8x32xf32>
    %162 = arith.mulf %161, %161 : vector<8x32xf32>
    %cst_71 = arith.constant dense<0.000000e+00> : vector<8xf32>
    %163 = vector.multi_reduction <add>, %162, %cst_71 [1] : vector<8x32xf32> to vector<8xf32>
    %164 = vector.shape_cast %163 : vector<8xf32> to vector<8x1xf32>
    %cst_72 = arith.constant 3.200000e+01 : f32
    %165 = vector.broadcast %cst_72 : f32 to vector<8x1xf32>
    %166 = arith.divf %164, %165 : vector<8x1xf32>
    %167 = vector.broadcast %159 : vector<8x1xf32> to vector<8x32xf32>
    %168 = arith.subf %153, %167 : vector<8x32xf32>
    %cst_73 = arith.constant 9.99999974E-6 : f32
    %169 = vector.broadcast %cst_73 : f32 to vector<8x1xf32>
    %170 = arith.addf %166, %169 : vector<8x1xf32>
    %171 = math.rsqrt %170 : vector<8x1xf32>
    %172 = vector.broadcast %171 : vector<8x1xf32> to vector<8x32xf32>
    %173 = arith.mulf %168, %172 : vector<8x32xf32>
    %174 = vector.broadcast %154 : vector<1x32xf32> to vector<8x32xf32>
    %175 = arith.mulf %173, %174 : vector<8x32xf32>
    %176 = vector.broadcast %155 : vector<1x32xf32> to vector<8x32xf32>
    %177 = arith.addf %175, %176 : vector<8x32xf32>
    %c0_74 = arith.constant 0 : index
    %c0_75 = arith.constant 0 : index
    %c0_76 = arith.constant 0 : index
    %178 = vector.load %arg17[%c0_74, %c0_75, %c0_76] : memref<1x8x32xf32, #tpu.memory_space<vmem>>, vector<1x8x32xf32>
    %179 = vector.shape_cast %178 : vector<1x8x32xf32> to vector<8x32xf32>
    %180 = vector.shape_cast %177 : vector<8x32xf32> to vector<1x8x32xf32>
    tpu.vector_store %arg17[%c0_74, %c0_75, %c0_76], %180 {strides = array<i32>} : memref<1x8x32xf32, #tpu.memory_space<vmem>>, vector<1x8x32xf32>,
    return
  }
  func.func @transform_0(%arg0: i32, %arg1: i32) -> (i32, i32, i32) {
    %c0_i32 = arith.constant 0 : i32
    %c0_i32_0 = arith.constant 0 : i32
    return %arg0, %arg1, %c0_i32 : i32, i32, i32
  }
  func.func @transform_1(%arg0: i32, %arg1: i32) -> (i32, i32, i32) {
    %c0_i32 = arith.constant 0 : i32
    %c0_i32_0 = arith.constant 0 : i32
    %c0_i32_1 = arith.constant 0 : i32
    return %arg0, %c0_i32, %c0_i32_0 : i32, i32, i32
  }
  func.func @transform_2(%arg0: i32, %arg1: i32) -> (i32, i32, i32) {
    %c0_i32 = arith.constant 0 : i32
    %c0_i32_0 = arith.constant 0 : i32
    %c0_i32_1 = arith.constant 0 : i32
    return %arg0, %c0_i32, %c0_i32_0 : i32, i32, i32
  }
  func.func @transform_3(%arg0: i32, %arg1: i32) -> (i32, i32) {
    %c0_i32 = arith.constant 0 : i32
    %c0_i32_0 = arith.constant 0 : i32
    %c0_i32_1 = arith.constant 0 : i32
    return %c0_i32, %c0_i32_0 : i32, i32
  }
  func.func @transform_4(%arg0: i32, %arg1: i32) -> (i32, i32) {
    %c0_i32 = arith.constant 0 : i32
    %c0_i32_0 = arith.constant 0 : i32
    %c0_i32_1 = arith.constant 0 : i32
    return %c0_i32, %c0_i32_0 : i32, i32
  }
  func.func @transform_5(%arg0: i32, %arg1: i32) -> (i32, i32) {
    %c0_i32 = arith.constant 0 : i32
    %c0_i32_0 = arith.constant 0 : i32
    %c0_i32_1 = arith.constant 0 : i32
    return %c0_i32, %c0_i32_0 : i32, i32
  }
  func.func @transform_6(%arg0: i32, %arg1: i32) -> (i32, i32) {
    %c0_i32 = arith.constant 0 : i32
    %c0_i32_0 = arith.constant 0 : i32
    %c0_i32_1 = arith.constant 0 : i32
    return %c0_i32, %c0_i32_0 : i32, i32
  }
  func.func @transform_7(%arg0: i32, %arg1: i32) -> (i32, i32) {
    %c0_i32 = arith.constant 0 : i32
    %c0_i32_0 = arith.constant 0 : i32
    %c0_i32_1 = arith.constant 0 : i32
    return %c0_i32, %c0_i32_0 : i32, i32
  }
  func.func @transform_8(%arg0: i32, %arg1: i32) -> (i32, i32) {
    %c0_i32 = arith.constant 0 : i32
    %c0_i32_0 = arith.constant 0 : i32
    %c0_i32_1 = arith.constant 0 : i32
    return %c0_i32, %c0_i32_0 : i32, i32
  }
  func.func @transform_9(%arg0: i32, %arg1: i32) -> (i32, i32) {
    %c0_i32 = arith.constant 0 : i32
    %c0_i32_0 = arith.constant 0 : i32
    %c0_i32_1 = arith.constant 0 : i32
    return %c0_i32, %c0_i32_0 : i32, i32
  }
  func.func @transform_10(%arg0: i32, %arg1: i32) -> (i32, i32) {
    %c0_i32 = arith.constant 0 : i32
    %c0_i32_0 = arith.constant 0 : i32
    %c0_i32_1 = arith.constant 0 : i32
    return %c0_i32, %c0_i32_0 : i32, i32
  }
  func.func @transform_11(%arg0: i32, %arg1: i32) -> (i32, i32) {
    %c0_i32 = arith.constant 0 : i32
    %c0_i32_0 = arith.constant 0 : i32
    %c0_i32_1 = arith.constant 0 : i32
    return %c0_i32, %c0_i32_0 : i32, i32
  }
  func.func @transform_12(%arg0: i32, %arg1: i32) -> (i32, i32) {
    %c0_i32 = arith.constant 0 : i32
    %c0_i32_0 = arith.constant 0 : i32
    %c0_i32_1 = arith.constant 0 : i32
    return %c0_i32, %c0_i32_0 : i32, i32
  }
  func.func @transform_13(%arg0: i32, %arg1: i32) -> (i32, i32) {
    %c0_i32 = arith.constant 0 : i32
    %c0_i32_0 = arith.constant 0 : i32
    %c0_i32_1 = arith.constant 0 : i32
    return %c0_i32, %c0_i32_0 : i32, i32
  }
  func.func @transform_14(%arg0: i32, %arg1: i32) -> (i32, i32) {
    %c0_i32 = arith.constant 0 : i32
    %c0_i32_0 = arith.constant 0 : i32
    %c0_i32_1 = arith.constant 0 : i32
    return %c0_i32, %c0_i32_0 : i32, i32
  }
  func.func @transform_15(%arg0: i32, %arg1: i32) -> (i32, i32, i32) {
    %c0_i32 = arith.constant 0 : i32
    %c0_i32_0 = arith.constant 0 : i32
    return %arg0, %arg1, %c0_i32 : i32, i32, i32
  }
}

</mosaic_0001>

<llo_original>
// kernel: tpu_custom_call.1
$region0: #{tpu_custom_call.1}
  #allocation0 [shape = 'u32[]', space=smem, size = 0x4, offset = 0x4, fixed_abs, tag = 'smem constant byte address 0x4 - core index']
  #allocation1 [shape = 'u32[144,128]{1,0:T(1,128)}', space=vmem, size = 0x12000, scoped, tag = 'internal scratch']
  #allocation2 [shape = 'bf16[8,32]{1,0:T(8,128)(2,1)}', space=vmem, size = 0x800, scoped, tag = 'scratch operand']
  #allocation3 [shape = 'bf16[8,32]{1,0:T(8,128)(2,1)}', space=vmem, size = 0x800, scoped, tag = 'scratch operand']
  #allocation4 [shape = 'bf16[8,32]{1,0:T(8,128)(2,1)}', space=vmem, size = 0x800, scoped, tag = 'scratch operand']
  %s0 = inlined_call_operand.vmem [shape: f32[2,8,32], index: 0, kind: input, shape index: {}]
  %s1 = inlined_call_operand.vmem [shape: f32[2,8,32], index: 1, kind: input, shape index: {}]
  %s2 = inlined_call_operand.vmem [shape: f32[2,1,8], index: 2, kind: input, shape index: {}]
  %s3 = inlined_call_operand.vmem [shape: bf16[32,32], index: 3, kind: input, shape index: {}]
  %s4 = inlined_call_operand.hbm [shape: f32[1,32], index: 4, kind: input, shape index: {}]
  %s5 = inlined_call_operand.vmem [shape: bf16[32,64], index: 5, kind: input, shape index: {}]
  %s6 = inlined_call_operand.hbm [shape: f32[1,64], index: 6, kind: input, shape index: {}]
  %s7 = inlined_call_operand.vmem [shape: bf16[32,32], index: 7, kind: input, shape index: {}]
  %s8 = inlined_call_operand.hbm [shape: f32[1,32], index: 8, kind: input, shape index: {}]
  %s9 = inlined_call_operand.vmem [shape: bf16[32,128], index: 9, kind: input, shape index: {}]
  %s10 = inlined_call_operand.vmem [shape: f32[1,128], index: 10, kind: input, shape index: {}]
  %s11 = inlined_call_operand.vmem [shape: bf16[128,32], index: 11, kind: input, shape index: {}]
  %s12 = inlined_call_operand.vmem [shape: f32[1,32], index: 12, kind: input, shape index: {}]
  %s13 = inlined_call_operand.vmem [shape: f32[1,32], index: 13, kind: input, shape index: {}]
  %s14 = inlined_call_operand.vmem [shape: f32[1,32], index: 14, kind: input, shape index: {}]
  %s15 = inlined_call_operand.hbm [shape: f32[2,8,32], index: 15, kind: output, shape index: {}]
  %s16 = sld [smem:[#allocation0]]
  $region109: #{tpu_custom_call.1} parent=0
    _
  %s18 = ssub.s32 1, %s16
  %s19 = scalar_select 0, %s18, %s16
  $region1: #{tpu_custom_call.1} parent=0
    #allocation5 [shape = 'u8[512]{0}', space=vmem, size = 0x400, scoped, tag = 'input window, operand 4, single buffered']
    #allocation6 [shape = 's32[2]{0}', space=sflag, size = 0x8, scoped, tag = 'scoped memory for tpu_custom_call.1']
    #allocation7 [shape = 's32[2]{0}', space=sflag, size = 0x8, scoped, tag = 'scoped memory for tpu_custom_call.1']
    #allocation8 [shape = 'u8[512]{0}', space=vmem, size = 0x400, scoped, tag = 'input window, operand 6, single buffered']
    #allocation9 [shape = 's32[1]{0}', space=sflag, size = 0x4, scoped, tag = 'scoped memory for tpu_custom_call.1']
    #allocation10 [shape = 'u8[512]{0}', space=vmem, size = 0x400, scoped, tag = 'input window, operand 8, single buffered']
    #allocation11 [shape = 'u8[8192]{0}', space=vmem, size = 0x2000, scoped, tag = 'output window, operand 0']
    %20 = vsyncpa [#allocation6], 0
    %21 = vsyncpa [#allocation9], 0
    %22 = vsyncpa [#allocation7], 0
    %s23 = scalar_lea.sflag [#allocation7], 1
    %24 = vsyncpa %s23, 0
    loop: start=0, step=1, limit=4
    $region2: #{tpu_custom_call.1} parent=1 // loop_pre_header
      _
    $region3: #{tpu_custom_call.1} parent=1 // loop_header
      %s26 = sphi 0, %s30
      %p27 = scmp.ge.s32.totalorder %s26, 4
      %s33 = sphi 0, %s45
      %s34 = sphi 0, %s41
      %s35 = sphi 0, %s33
      %s36 = sphi 0, %s34
      %s37 = sphi 0, %s35
      %s38 = sphi 0, %s36
      %s50 = sphi 0, %s52
      %s53 = sphi 0, %s50
      %s54 = sphi 0, %s53
      %s70 = sphi 0, %s54
      %s76 = sphi 0, %s78
      %s79 = sphi 0, %s76
      %s80 = sphi 0, %s79
      %s96 = sphi 0, %s80
      %s102 = sphi 0, %s104
      %s105 = sphi 0, %s102
      %s106 = sphi 0, %s105
      %s122 = sphi 0, %s106
      %s126 = sphi 0, %s126
      %s128 = sphi 0, %s126
      %s129 = sphi 0, %s128
      %s143 = sphi 0, %s129
      %s147 = sphi 0, %s147
      %s149 = sphi 0, %s147
      %s150 = sphi 0, %s149
      %s164 = sphi 0, %s150
      %s168 = sphi 0, %s168
      %s170 = sphi 0, %s168
      %s171 = sphi 0, %s170
      %s185 = sphi 0, %s171
      %s189 = sphi 0, %s189
      %s191 = sphi 0, %s189
      %s192 = sphi 0, %s191
      %s206 = sphi 0, %s192
      %s210 = sphi 0, %s210
      %s212 = sphi 0, %s210
      %s213 = sphi 0, %s212
      %s227 = sphi 0, %s213
      %s231 = sphi 0, %s231
      %s233 = sphi 0, %s231
      %s234 = sphi 0, %s233
      %s248 = sphi 0, %s234
      %s252 = sphi 0, %s252
      %s254 = sphi 0, %s252
      %s255 = sphi 0, %s254
      %s269 = sphi 0, %s255
      %s273 = sphi 0, %s273
      %s275 = sphi 0, %s273
      %s276 = sphi 0, %s275
      %s290 = sphi 0, %s276
      %s294 = sphi 0, %s294
      %s296 = sphi 0, %s294
      %s297 = sphi 0, %s296
      %s311 = sphi 0, %s297
      %s315 = sphi 0, %s315
      %s317 = sphi 0, %s315
      %s318 = sphi 0, %s317
      %s332 = sphi 0, %s318
      %s336 = sphi 0, %s336
      %s338 = sphi 0, %s336
      %s339 = sphi 0, %s338
      %s353 = sphi 0, %s339
      %s357 = sphi 0, %s357
      %s359 = sphi 0, %s357
      %s360 = sphi 0, %s359
      %s374 = sphi 0, %s360
      %s382 = sphi 0, %s384
      %s385 = sphi 0, %s382
      %s386 = sphi 0, %s385
      %s402 = sphi 0, %s386
    $region4: #{tpu_custom_call.1} parent=1 // loop_header_branch
      %29 = sbr.rel (%p27) target = $region8
    $region5: #{tpu_custom_call.1} parent=1 // loop_body
      %s31 = ssub.s32 %s26, 1
      %s32 = ssub.s32 %s26, 2
      %s39 = sadd.s32 1, %s34
      %p40 = scmp.ge.s32.totalorder %s39, 1
      %s41 = scalar_select %p40, 0, %s39
      %s42 = sadd.s32 1, %s33
      %s43 = scalar_select %p40, %s42, %s33
      %p44 = scmp.ge.s32.totalorder %s43, 2
      %s45 = scalar_select %p44, 0, %s43
      %s46 = ssub.s32 %s33, %s45
      %s47 = ssub.s32 %s34, %s41
      %s48 = sor.u32 %s46, %s47
      %p49 = scmp.eq.s32.totalorder %s48, 0
      %s51 = sadd.s32 %s50, 1
      %s52 = scalar_select %p49, %s50, %s51
      %p55 = pneg %p49
      %p56 = scmp.eq.s32.totalorder %s26, 1
      %p57 = por %p55, %p56
      %p58 = scmp.ne.s32.totalorder %s50, %s53
      %p59 = scmp.eq.s32.totalorder %s26, 0
      %p60 = por %p58, %p59
      %p61 = scmp.ne.s32.totalorder %s50, %s53
      %p62 = scmp.eq.s32.totalorder %s31, 1
      %p63 = por %p61, %p62
      %p64 = scmp.ne.s32.totalorder %s53, %s54
      %p65 = scmp.eq.s32.totalorder %s31, 0
      %p66 = por %p64, %p65
      %p67 = scmp.ne.s32.totalorder %s53, %s54
      %p68 = scmp.eq.s32.totalorder %s32, 1
      %p69 = por %p67, %p68
      %p71 = scmp.ne.s32.totalorder %s54, %s70
      %p72 = scmp.eq.s32.totalorder %s32, 0
      %p73 = por %p71, %p72
      %s74 = ssub.s32 %s33, %s45
      %p75 = scmp.eq.s32.totalorder %s74, 0
      %s77 = sadd.s32 %s76, 1
      %s78 = scalar_select %p75, %s76, %s77
      %p81 = pneg %p75
      %p82 = scmp.eq.s32.totalorder %s26, 1
      %p83 = por %p81, %p82
      %p84 = scmp.ne.s32.totalorder %s76, %s79
      %p85 = scmp.eq.s32.totalorder %s26, 0
      %p86 = por %p84, %p85
      %p87 = scmp.ne.s32.totalorder %s76, %s79
      %p88 = scmp.eq.s32.totalorder %s31, 1
      %p89 = por %p87, %p88
      %p90 = scmp.ne.s32.totalorder %s79, %s80
      %p91 = scmp.eq.s32.totalorder %s31, 0
      %p92 = por %p90, %p91
      %p93 = scmp.ne.s32.totalorder %s79, %s80
      %p94 = scmp.eq.s32.totalorder %s32, 1
      %p95 = por %p93, %p94
      %p97 = scmp.ne.s32.totalorder %s80, %s96
      %p98 = scmp.eq.s32.totalorder %s32, 0
      %p99 = por %p97, %p98
      %s100 = ssub.s32 %s33, %s45
      %p101 = scmp.eq.s32.totalorder %s100, 0
      %s103 = sadd.s32 %s102, 1
      %s104 = scalar_select %p101, %s102, %s103
      %p107 = pneg %p101
      %p108 = scmp.eq.s32.totalorder %s26, 1
      %p109 = por %p107, %p108
      %p110 = scmp.ne.s32.totalorder %s102, %s105
      %p111 = scmp.eq.s32.totalorder %s26, 0
      %p112 = por %p110, %p111
      %p113 = scmp.ne.s32.totalorder %s102, %s105
      %p114 = scmp.eq.s32.totalorder %s31, 1
      %p115 = por %p113, %p114
      %p116 = scmp.ne.s32.totalorder %s105, %s106
      %p117 = scmp.eq.s32.totalorder %s31, 0
      %p118 = por %p116, %p117
      %p119 = scmp.ne.s32.totalorder %s105, %s106
      %p120 = scmp.eq.s32.totalorder %s32, 1
      %p121 = por %p119, %p120
      %p123 = scmp.ne.s32.totalorder %s106, %s122
      %p124 = scmp.eq.s32.totalorder %s32, 0
      %p125 = por %p123, %p124
      %s127 = sadd.s32 %s126, 1
      %p130 = scmp.eq.s32.totalorder %s26, 1
      %p131 = scmp.ne.s32.totalorder %s126, %s128
      %p132 = scmp.eq.s32.totalorder %s26, 0
      %p133 = por %p131, %p132
      %p134 = scmp.ne.s32.totalorder %s126, %s128
      %p135 = scmp.eq.s32.totalorder %s31, 1
      %p136 = por %p134, %p135
      %p137 = scmp.ne.s32.totalorder %s128, %s129
      %p138 = scmp.eq.s32.totalorder %s31, 0
      %p139 = por %p137, %p138
      %p140 = scmp.ne.s32.totalorder %s128, %s129
      %p141 = scmp.eq.s32.totalorder %s32, 1
      %p142 = por %p140, %p141
      %p144 = scmp.ne.s32.totalorder %s129, %s143
      %p145 = scmp.eq.s32.totalorder %s32, 0
      %p146 = por %p144, %p145
      %s148 = sadd.s32 %s147, 1
      %p151 = scmp.eq.s32.totalorder %s26, 1
      %p152 = scmp.ne.s32.totalorder %s147, %s149
      %p153 = scmp.eq.s32.totalorder %s26, 0
      %p154 = por %p152, %p153
      %p155 = scmp.ne.s32.totalorder %s147, %s149
      %p156 = scmp.eq.s32.totalorder %s31, 1
      %p157 = por %p155, %p156
      %p158 = scmp.ne.s32.totalorder %s149, %s150
      %p159 = scmp.eq.s32.totalorder %s31, 0
      %p160 = por %p158, %p159
      %p161 = scmp.ne.s32.totalorder %s149, %s150
      %p162 = scmp.eq.s32.totalorder %s32, 1
      %p163 = por %p161, %p162
      %p165 = scmp.ne.s32.totalorder %s150, %s164
      %p166 = scmp.eq.s32.totalorder %s32, 0
      %p167 = por %p165, %p166
      %s169 = sadd.s32 %s168, 1
      %p172 = scmp.eq.s32.totalorder %s26, 1
      %p173 = scmp.ne.s32.totalorder %s168, %s170
      %p174 = scmp.eq.s32.totalorder %s26, 0
      %p175 = por %p173, %p174
      %p176 = scmp.ne.s32.totalorder %s168, %s170
      %p177 = scmp.eq.s32.totalorder %s31, 1
      %p178 = por %p176, %p177
      %p179 = scmp.ne.s32.totalorder %s170, %s171
      %p180 = scmp.eq.s32.totalorder %s31, 0
      %p181 = por %p179, %p180
      %p182 = scmp.ne.s32.totalorder %s170, %s171
      %p183 = scmp.eq.s32.totalorder %s32, 1
      %p184 = por %p182, %p183
      %p186 = scmp.ne.s32.totalorder %s171, %s185
      %p187 = scmp.eq.s32.totalorder %s32, 0
      %p188 = por %p186, %p187
      %s190 = sadd.s32 %s189, 1
      %p193 = scmp.eq.s32.totalorder %s26, 1
      %p194 = scmp.ne.s32.totalorder %s189, %s191
      %p195 = scmp.eq.s32.totalorder %s26, 0
      %p196 = por %p194, %p195
      %p197 = scmp.ne.s32.totalorder %s189, %s191
      %p198 = scmp.eq.s32.totalorder %s31, 1
      %p199 = por %p197, %p198
      %p200 = scmp.ne.s32.totalorder %s191, %s192
      %p201 = scmp.eq.s32.totalorder %s31, 0
      %p202 = por %p200, %p201
      %p203 = scmp.ne.s32.totalorder %s191, %s192
      %p204 = scmp.eq.s32.totalorder %s32, 1
      %p205 = por %p203, %p204
      %p207 = scmp.ne.s32.totalorder %s192, %s206
      %p208 = scmp.eq.s32.totalorder %s32, 0
      %p209 = por %p207, %p208
      %s211 = sadd.s32 %s210, 1
      %p214 = scmp.eq.s32.totalorder %s26, 1
      %p215 = scmp.ne.s32.totalorder %s210, %s212
      %p216 = scmp.eq.s32.totalorder %s26, 0
      %p217 = por %p215, %p216
      %p218 = scmp.ne.s32.totalorder %s210, %s212
      %p219 = scmp.eq.s32.totalorder %s31, 1
      %p220 = por %p218, %p219
      %p221 = scmp.ne.s32.totalorder %s212, %s213
      %p222 = scmp.eq.s32.totalorder %s31, 0
      %p223 = por %p221, %p222
      %p224 = scmp.ne.s32.totalorder %s212, %s213
      %p225 = scmp.eq.s32.totalorder %s32, 1
      %p226 = por %p224, %p225
      %p228 = scmp.ne.s32.totalorder %s213, %s227
      %p229 = scmp.eq.s32.totalorder %s32, 0
      %p230 = por %p228, %p229
      %s232 = sadd.s32 %s231, 1
      %p235 = scmp.eq.s32.totalorder %s26, 1
      %p236 = scmp.ne.s32.totalorder %s231, %s233
      %p237 = scmp.eq.s32.totalorder %s26, 0
      %p238 = por %p236, %p237
      %p239 = scmp.ne.s32.totalorder %s231, %s233
      %p240 = scmp.eq.s32.totalorder %s31, 1
      %p241 = por %p239, %p240
      %p242 = scmp.ne.s32.totalorder %s233, %s234
      %p243 = scmp.eq.s32.totalorder %s31, 0
      %p244 = por %p242, %p243
      %p245 = scmp.ne.s32.totalorder %s233, %s234
      %p246 = scmp.eq.s32.totalorder %s32, 1
      %p247 = por %p245, %p246
      %p249 = scmp.ne.s32.totalorder %s234, %s248
      %p250 = scmp.eq.s32.totalorder %s32, 0
      %p251 = por %p249, %p250
      %s253 = sadd.s32 %s252, 1
      %p256 = scmp.eq.s32.totalorder %s26, 1
      %p257 = scmp.ne.s32.totalorder %s252, %s254
      %p258 = scmp.eq.s32.totalorder %s26, 0
      %p259 = por %p257, %p258
      %p260 = scmp.ne.s32.totalorder %s252, %s254
      %p261 = scmp.eq.s32.totalorder %s31, 1
      %p262 = por %p260, %p261
      %p263 = scmp.ne.s32.totalorder %s254, %s255
      %p264 = scmp.eq.s32.totalorder %s31, 0
      %p265 = por %p263, %p264
      %p266 = scmp.ne.s32.totalorder %s254, %s255
      %p267 = scmp.eq.s32.totalorder %s32, 1
      %p268 = por %p266, %p267
      %p270 = scmp.ne.s32.totalorder %s255, %s269
      %p271 = scmp.eq.s32.totalorder %s32, 0
      %p272 = por %p270, %p271
      %s274 = sadd.s32 %s273, 1
      %p277 = scmp.eq.s32.totalorder %s26, 1
      %p278 = scmp.ne.s32.totalorder %s273, %s275
      %p279 = scmp.eq.s32.totalorder %s26, 0
      %p280 = por %p278, %p279
      %p281 = scmp.ne.s32.totalorder %s273, %s275
      %p282 = scmp.eq.s32.totalorder %s31, 1
      %p283 = por %p281, %p282
      %p284 = scmp.ne.s32.totalorder %s275, %s276
      %p285 = scmp.eq.s32.totalorder %s31, 0
      %p286 = por %p284, %p285
      %p287 = scmp.ne.s32.totalorder %s275, %s276
      %p288 = scmp.eq.s32.totalorder %s32, 1
      %p289 = por %p287, %p288
      %p291 = scmp.ne.s32.totalorder %s276, %s290
      %p292 = scmp.eq.s32.totalorder %s32, 0
      %p293 = por %p291, %p292
      %s295 = sadd.s32 %s294, 1
      %p298 = scmp.eq.s32.totalorder %s26, 1
      %p299 = scmp.ne.s32.totalorder %s294, %s296
      %p300 = scmp.eq.s32.totalorder %s26, 0
      %p301 = por %p299, %p300
      %p302 = scmp.ne.s32.totalorder %s294, %s296
      %p303 = scmp.eq.s32.totalorder %s31, 1
      %p304 = por %p302, %p303
      %p305 = scmp.ne.s32.totalorder %s296, %s297
      %p306 = scmp.eq.s32.totalorder %s31, 0
      %p307 = por %p305, %p306
      %p308 = scmp.ne.s32.totalorder %s296, %s297
      %p309 = scmp.eq.s32.totalorder %s32, 1
      %p310 = por %p308, %p309
      %p312 = scmp.ne.s32.totalorder %s297, %s311
      %p313 = scmp.eq.s32.totalorder %s32, 0
      %p314 = por %p312, %p313
      %s316 = sadd.s32 %s315, 1
      %p319 = scmp.eq.s32.totalorder %s26, 1
      %p320 = scmp.ne.s32.totalorder %s315, %s317
      %p321 = scmp.eq.s32.totalorder %s26, 0
      %p322 = por %p320, %p321
      %p323 = scmp.ne.s32.totalorder %s315, %s317
      %p324 = scmp.eq.s32.totalorder %s31, 1
      %p325 = por %p323, %p324
      %p326 = scmp.ne.s32.totalorder %s317, %s318
      %p327 = scmp.eq.s32.totalorder %s31, 0
      %p328 = por %p326, %p327
      %p329 = scmp.ne.s32.totalorder %s317, %s318
      %p330 = scmp.eq.s32.totalorder %s32, 1
      %p331 = por %p329, %p330
      %p333 = scmp.ne.s32.totalorder %s318, %s332
      %p334 = scmp.eq.s32.totalorder %s32, 0
      %p335 = por %p333, %p334
      %s337 = sadd.s32 %s336, 1
      %p340 = scmp.eq.s32.totalorder %s26, 1
      %p341 = scmp.ne.s32.totalorder %s336, %s338
      %p342 = scmp.eq.s32.totalorder %s26, 0
      %p343 = por %p341, %p342
      %p344 = scmp.ne.s32.totalorder %s336, %s338
      %p345 = scmp.eq.s32.totalorder %s31, 1
      %p346 = por %p344, %p345
      %p347 = scmp.ne.s32.totalorder %s338, %s339
      %p348 = scmp.eq.s32.totalorder %s31, 0
      %p349 = por %p347, %p348
      %p350 = scmp.ne.s32.totalorder %s338, %s339
      %p351 = scmp.eq.s32.totalorder %s32, 1
      %p352 = por %p350, %p351
      %p354 = scmp.ne.s32.totalorder %s339, %s353
      %p355 = scmp.eq.s32.totalorder %s32, 0
      %p356 = por %p354, %p355
      %s358 = sadd.s32 %s357, 1
      %p361 = scmp.eq.s32.totalorder %s26, 1
      %p362 = scmp.ne.s32.totalorder %s357, %s359
      %p363 = scmp.eq.s32.totalorder %s26, 0
      %p364 = por %p362, %p363
      %p365 = scmp.ne.s32.totalorder %s357, %s359
      %p366 = scmp.eq.s32.totalorder %s31, 1
      %p367 = por %p365, %p366
      %p368 = scmp.ne.s32.totalorder %s359, %s360
      %p369 = scmp.eq.s32.totalorder %s31, 0
      %p370 = por %p368, %p369
      %p371 = scmp.ne.s32.totalorder %s359, %s360
      %p372 = scmp.eq.s32.totalorder %s32, 1
      %p373 = por %p371, %p372
      %p375 = scmp.ne.s32.totalorder %s360, %s374
      %p376 = scmp.eq.s32.totalorder %s32, 0
      %p377 = por %p375, %p376
      %s378 = ssub.s32 %s33, %s45
      %s379 = ssub.s32 %s34, %s41
      %s380 = sor.u32 %s378, %s379
      %p381 = scmp.eq.s32.totalorder %s380, 0
      %s383 = sadd.s32 %s382, 1
      %s384 = scalar_select %p381, %s382, %s383
      %p387 = pneg %p381
      %p388 = scmp.eq.s32.totalorder %s26, 1
      %p389 = por %p387, %p388
      %p390 = scmp.ne.s32.totalorder %s382, %s385
      %p391 = scmp.eq.s32.totalorder %s26, 0
      %p392 = por %p390, %p391
      %p393 = scmp.ne.s32.totalorder %s382, %s385
      %p394 = scmp.eq.s32.totalorder %s31, 1
      %p395 = por %p393, %p394
      %p396 = scmp.ne.s32.totalorder %s385, %s386
      %p397 = scmp.eq.s32.totalorder %s31, 0
      %p398 = por %p396, %p397
      %p399 = scmp.ne.s32.totalorder %s385, %s386
      %p400 = scmp.eq.s32.totalorder %s32, 1
      %p401 = por %p399, %p400
      %p403 = scmp.ne.s32.totalorder %s386, %s402
      %p404 = scmp.eq.s32.totalorder %s32, 0
      %p405 = por %p403, %p404
      %p406 = scmp.le.s32.totalorder 1, %s26
      %p407 = scmp.lt.s32.totalorder %s26, 3
      %p408 = pnand %p406, %p407
      %p409 = pneg %p408
      // Predicated region
      $region9: #{tpu_custom_call.1} parent=5 // pred_check
        _
      $region10: #{tpu_custom_call.1} parent=5 // pred_check_branch
        %411 = sbr.rel (%p408) target = $region12
      $region11: #{tpu_custom_call.1} parent=5 // pred_region
        %s412 = ssub.s32 %s26, 1
        // Predicated region
        $region13: #{tpu_custom_call.1} parent=11 // pred_check
          %p413 = pneg %p139
        $region14: #{tpu_custom_call.1} parent=11 // pred_check_branch
          %415 = sbr.rel (%p413) target = $region16
        $region15: #{tpu_custom_call.1} parent=11 // pred_region
          _
        $region16: #{tpu_custom_call.1} parent=11 // pred_fallthru
          _
        // Predicated region
        $region17: #{tpu_custom_call.1} parent=11 // pred_check
          %p416 = pneg %p160
        $region18: #{tpu_custom_call.1} parent=11 // pred_check_branch
          %418 = sbr.rel (%p416) target = $region20
        $region19: #{tpu_custom_call.1} parent=11 // pred_region
          %s420 = ssub.s32 16, 16
          %421 = vsyncadd [#allocation6], %s420
          %s423 = sshll.u32 [#allocation5], 4
          %s424 = int_to_ptr.vmem [resolvable:$true] %s423
          %426 = dma.hbm_to_vmem [thread:$0]  %s4, 16, %s424, [#allocation6]
        $region20: #{tpu_custom_call.1} parent=11 // pred_fallthru
          _
        // Predicated region
        $region21: #{tpu_custom_call.1} parent=11 // pred_check
          %p427 = pneg %p181
        $region22: #{tpu_custom_call.1} parent=11 // pred_check_branch
          %429 = sbr.rel (%p427) target = $region24
        $region23: #{tpu_custom_call.1} parent=11 // pred_region
          _
        $region24: #{tpu_custom_call.1} parent=11 // pred_fallthru
          _
        // Predicated region
        $region25: #{tpu_custom_call.1} parent=11 // pred_check
          %p430 = pneg %p202
        $region26: #{tpu_custom_call.1} parent=11 // pred_check_branch
          %432 = sbr.rel (%p430) target = $region28
        $region27: #{tpu_custom_call.1} parent=11 // pred_region
          %s434 = ssub.s32 16, 16
          %435 = vsyncadd [#allocation9], %s434
          %s437 = sshll.u32 [#allocation8], 4
          %s438 = int_to_ptr.vmem [resolvable:$true] %s437
          %440 = dma.hbm_to_vmem [thread:$0]  %s6, 16, %s438, [#allocation9]
        $region28: #{tpu_custom_call.1} parent=11 // pred_fallthru
          _
        // Predicated region
        $region29: #{tpu_custom_call.1} parent=11 // pred_check
          %p441 = pneg %p223
        $region30: #{tpu_custom_call.1} parent=11 // pred_check_branch
          %443 = sbr.rel (%p441) target = $region32
        $region31: #{tpu_custom_call.1} parent=11 // pred_region
          _
        $region32: #{tpu_custom_call.1} parent=11 // pred_fallthru
          _
        // Predicated region
        $region33: #{tpu_custom_call.1} parent=11 // pred_check
          %p444 = pneg %p244
        $region34: #{tpu_custom_call.1} parent=11 // pred_check_branch
          %446 = sbr.rel (%p444) target = $region36
        $region35: #{tpu_custom_call.1} parent=11 // pred_region
          %s448 = ssub.s32 16, 16
          %449 = vsyncadd [#allocation9], %s448
          %s451 = sshll.u32 [#allocation10], 4
          %s452 = int_to_ptr.vmem [resolvable:$true] %s451
          %454 = dma.hbm_to_vmem [thread:$0]  %s8, 16, %s452, [#allocation9]
        $region36: #{tpu_custom_call.1} parent=11 // pred_fallthru
          _
        // Predicated region
        $region37: #{tpu_custom_call.1} parent=11 // pred_check
          %p455 = pneg %p265
        $region38: #{tpu_custom_call.1} parent=11 // pred_check_branch
          %457 = sbr.rel (%p455) target = $region40
        $region39: #{tpu_custom_call.1} parent=11 // pred_region
          _
        $region40: #{tpu_custom_call.1} parent=11 // pred_fallthru
          _
        // Predicated region
        $region41: #{tpu_custom_call.1} parent=11 // pred_check
          %p458 = pneg %p286
        $region42: #{tpu_custom_call.1} parent=11 // pred_check_branch
          %460 = sbr.rel (%p458) target = $region44
        $region43: #{tpu_custom_call.1} parent=11 // pred_region
          _
        $region44: #{tpu_custom_call.1} parent=11 // pred_fallthru
          _
        // Predicated region
        $region45: #{tpu_custom_call.1} parent=11 // pred_check
          %p461 = pneg %p307
        $region46: #{tpu_custom_call.1} parent=11 // pred_check_branch
          %463 = sbr.rel (%p461) target = $region48
        $region47: #{tpu_custom_call.1} parent=11 // pred_region
          _
        $region48: #{tpu_custom_call.1} parent=11 // pred_fallthru
          _
        // Predicated region
        $region49: #{tpu_custom_call.1} parent=11 // pred_check
          %p464 = pneg %p328
        $region50: #{tpu_custom_call.1} parent=11 // pred_check_branch
          %466 = sbr.rel (%p464) target = $region52
        $region51: #{tpu_custom_call.1} parent=11 // pred_region
          _
        $region52: #{tpu_custom_call.1} parent=11 // pred_fallthru
          _
        // Predicated region
        $region53: #{tpu_custom_call.1} parent=11 // pred_check
          %p467 = pneg %p349
        $region54: #{tpu_custom_call.1} parent=11 // pred_check_branch
          %469 = sbr.rel (%p467) target = $region56
        $region55: #{tpu_custom_call.1} parent=11 // pred_region
          _
        $region56: #{tpu_custom_call.1} parent=11 // pred_fallthru
          _
        // Predicated region
        $region57: #{tpu_custom_call.1} parent=11 // pred_check
          %p470 = pneg %p370
        $region58: #{tpu_custom_call.1} parent=11 // pred_check_branch
          %472 = sbr.rel (%p470) target = $region60
        $region59: #{tpu_custom_call.1} parent=11 // pred_region
          _
        $region60: #{tpu_custom_call.1} parent=11 // pred_fallthru
          _
      $region12: #{tpu_custom_call.1} parent=5 // pred_fallthru
        _
      %p473 = scmp.lt.s32.totalorder %s26, 2
      // Predicated region
      $region61: #{tpu_custom_call.1} parent=5 // pred_check
        %p474 = pneg %p473
      $region62: #{tpu_custom_call.1} parent=5 // pred_check_branch
        %476 = sbr.rel (%p474) target = $region64
      $region63: #{tpu_custom_call.1} parent=5 // pred_region
        // Predicated region
        $region65: #{tpu_custom_call.1} parent=63 // pred_check
          %p477 = pneg %p60
        $region66: #{tpu_custom_call.1} parent=63 // pred_check_branch
          %479 = sbr.rel (%p477) target = $region68
        $region67: #{tpu_custom_call.1} parent=63 // pred_region
          %p480 = scmp.lt.s32.totalorder %s33, 1
          %s481 = scalar_select %p480, %s33, 1
          %p482 = scmp.lt.s32.totalorder %s34, 0
          %s483 = scalar_select %p482, %s34, 0
          %s484 = sadd.s32 %s483, %s481
          %s485 = smul.addr %s484, 8
          %s486 = scalar_lea.vmem %s0, %s485
        $region68: #{tpu_custom_call.1} parent=63 // pred_fallthru
          _
        // Predicated region
        $region69: #{tpu_custom_call.1} parent=63 // pred_check
          %p487 = pneg %p86
        $region70: #{tpu_custom_call.1} parent=63 // pred_check_branch
          %489 = sbr.rel (%p487) target = $region72
        $region71: #{tpu_custom_call.1} parent=63 // pred_region
          %p490 = scmp.lt.s32.totalorder %s33, 1
          %s491 = scalar_select %p490, %s33, 1
          %s492 = smul.addr %s491, 8
          %s493 = scalar_lea.vmem %s1, %s492
        $region72: #{tpu_custom_call.1} parent=63 // pred_fallthru
          _
        // Predicated region
        $region73: #{tpu_custom_call.1} parent=63 // pred_check
          %p494 = pneg %p112
        $region74: #{tpu_custom_call.1} parent=63 // pred_check_branch
          %496 = sbr.rel (%p494) target = $region76
        $region75: #{tpu_custom_call.1} parent=63 // pred_region
          %p497 = scmp.lt.s32.totalorder %s33, 1
          %s498 = scalar_select %p497, %s33, 1
          %s499 = scalar_lea.vmem %s2, %s498
        $region76: #{tpu_custom_call.1} parent=63 // pred_fallthru
          _
      $region64: #{tpu_custom_call.1} parent=5 // pred_fallthru
        _
      %p500 = scmp.le.s32.totalorder 1, %s26
      %p501 = scmp.lt.s32.totalorder %s26, 3
      %p502 = pnand %p500, %p501
      %p503 = pneg %p502
      // Predicated region
      $region77: #{tpu_custom_call.1} parent=5 // pred_check
        _
      $region78: #{tpu_custom_call.1} parent=5 // pred_check_branch
        %505 = sbr.rel (%p502) target = $region80
      $region79: #{tpu_custom_call.1} parent=5 // pred_region
        %s506 = ssub.s32 %s26, 1
        // Predicated region
        $region81: #{tpu_custom_call.1} parent=79 // pred_check
          %p507 = pneg %p160
        $region82: #{tpu_custom_call.1} parent=79 // pred_check_branch
          %509 = sbr.rel (%p507) target = $region84
        $region83: #{tpu_custom_call.1} parent=79 // pred_region
          %510 = dma.done [#allocation6], 16
        $region84: #{tpu_custom_call.1} parent=79 // pred_fallthru
          _
        // Predicated region
        $region85: #{tpu_custom_call.1} parent=79 // pred_check
          %p511 = pneg %p202
        $region86: #{tpu_custom_call.1} parent=79 // pred_check_branch
          %513 = sbr.rel (%p511) target = $region88
        $region87: #{tpu_custom_call.1} parent=79 // pred_region
          %514 = dma.done [#allocation9], 16
        $region88: #{tpu_custom_call.1} parent=79 // pred_fallthru
          _
        // Predicated region
        $region89: #{tpu_custom_call.1} parent=79 // pred_check
          %p515 = pneg %p244
        $region90: #{tpu_custom_call.1} parent=79 // pred_check_branch
          %517 = sbr.rel (%p515) target = $region92
        $region91: #{tpu_custom_call.1} parent=79 // pred_region
          %518 = dma.done [#allocation9], 16
        $region92: #{tpu_custom_call.1} parent=79 // pred_fallthru
          _
        %p519 = scmp.lt.s32.totalorder %s35, 1
        %s520 = scalar_select %p519, %s35, 1
        %p521 = scmp.lt.s32.totalorder %s36, 0
        %s522 = scalar_select %p521, %s36, 0
        %s523 = sadd.s32 %s522, %s520
        %s524 = smul.addr %s523, 8
        %s525 = scalar_lea.vmem %s0, %s524
        %p526 = pneg %p66
        %p527 = pneg %p63
        %p528 = scmp.lt.s32.totalorder %s35, 1
        %s529 = scalar_select %p528, %s35, 1
        %s530 = smul.addr %s529, 8
        %s531 = scalar_lea.vmem %s1, %s530
        %p532 = pneg %p92
        %p533 = pneg %p89
        %p534 = scmp.lt.s32.totalorder %s35, 1
        %s535 = scalar_select %p534, %s35, 1
        %s536 = scalar_lea.vmem %s2, %s535
        %p537 = pneg %p118
        %p538 = pneg %p115
        %p539 = pneg %p139
        %p540 = pneg %p136
        %p541 = pneg %p160
        %p542 = pneg %p157
        %p543 = pneg %p181
        %p544 = pneg %p178
        %p545 = pneg %p202
        %p546 = pneg %p199
        %p547 = pneg %p223
        %p548 = pneg %p220
        %p549 = pneg %p244
        %p550 = pneg %p241
        %p551 = pneg %p265
        %p552 = pneg %p262
        %p553 = pneg %p286
        %p554 = pneg %p283
        %p555 = pneg %p307
        %p556 = pneg %p304
        %p557 = pneg %p328
        %p558 = pneg %p325
        %p559 = pneg %p349
        %p560 = pneg %p346
        %p561 = pneg %p370
        %p562 = pneg %p367
        %p563 = pneg %p398
        %p564 = pneg %p395
        %s565 = sand.u32 %s385, 1
        %s566 = scalar_lea.sflag [#allocation7], %s565
        %s567 = sand.u32 %s385, 1
        %s568 = smul.addr %s567, 8
        %s569 = scalar_lea.vmem [#allocation11], %s568
        %p570 = scmp.lt.s32.totalorder %s35, 1
        %s571 = scalar_select %p570, %s35, 1
        %p572 = scmp.lt.s32.totalorder %s36, 0
        %s573 = scalar_select %p572, %s36, 0
        %s574 = sadd.s32 %s573, %s571
        %s575 = smul.addr %s574, 8
        %s576 = scalar_lea.vmem %s0, %s575
        %p577 = scmp.lt.s32.totalorder %s35, 1
        %s578 = scalar_select %p577, %s35, 1
        %s579 = smul.addr %s578, 8
        %s580 = scalar_lea.vmem %s1, %s579
        %p581 = scmp.lt.s32.totalorder %s35, 1
        %s582 = scalar_select %p581, %s35, 1
        %s583 = scalar_lea.vmem %s2, %s582
        %p585 = scmp.eq.s32.totalorder %s36, 0
        // Predicated region
        $region93: #{tpu_custom_call.1} parent=79 // pred_check
          %p586 = pneg %p585
        $region94: #{tpu_custom_call.1} parent=79 // pred_check_branch
          %588 = sbr.rel (%p586) target = $region96
        $region95: #{tpu_custom_call.1} parent=79 // pred_region
          %v589 = vld [vmem:[%s580] sm:$0xff]
          %v590 = vpack.c.bf16 %v589, %v589
          %v591 = vld [vmem:[%s5] sm:$0xf]
          %v592 = vld [vmem:[%s5 + $0x4] sm:$0xf]
          %v593 = vld [vmem:[%s5 + $0x8] sm:$0xf]
          %v594 = vld [vmem:[%s5 + $0xc] sm:$0xf]
          %v595 = vld [vmem:[#allocation8] sm:$0x1]
          %v597 = vlaneseq
          %v598 = vshrl.u32 %v597, 7
          %v599 = vsub.s32 0, %v598
          %v600 = vrot.slane %v595, %v599
          %v606 = vunpack.c.l.b16 %v591
          %v607 = vunpack.c.l.b16 %v592
          %v608 = vunpack.c.l.b16 %v593
          %v609 = vunpack.c.l.b16 %v594
          %v610 = vpack.c.b16 %v607, %v606
          %v611 = vpack.c.b16 %v609, %v608
          %vm614 = vcmask 261120
          %v616 = vsel %vm614, %v590, 0
          %618 = vmatprep.subr.bf16.mxu0 0
          %619 = vmatpush1.bf16.msra.mxu0 %v610
          %620 = vmatprep.subr.bf16.mxu0 0
          %621 = vmatpush1.bf16.msra.mxu0 %v611
          %622 = vmatprep.subr.bf16.mxu0 0
          %623 = vmatpush1.bf16.msra.mxu0 0
          %624 = vmatprep.subr.bf16.mxu0 0
          %625 = vmatpush1.bf16.msra.mxu0 0
          %626 = vmatprep.subr.bf16.mxu0 0
          %627 = vmatpush1.bf16.msra.mxu0 0
          %628 = vmatprep.subr.bf16.mxu0 0
          %629 = vmatpush1.bf16.msra.mxu0 0
          %630 = vmatprep.subr.bf16.mxu0 0
          %631 = vmatpush1.bf16.msra.mxu0 0
          %632 = vmatprep.subr.bf16.mxu0 0
          %633 = vmatpush1.bf16.msra.mxu0 0
          %634 = vmatprep.subr.bf16.mxu0 0
          %635 = vmatpush1.bf16.msra.mxu0 0
          %636 = vmatprep.subr.bf16.mxu0 0
          %637 = vmatpush1.bf16.msra.mxu0 0
          %638 = vmatprep.subr.bf16.mxu0 0
          %639 = vmatpush1.bf16.msra.mxu0 0
          %640 = vmatprep.subr.bf16.mxu0 0
          %641 = vmatpush1.bf16.msra.mxu0 0
          %642 = vmatprep.subr.bf16.mxu0 0
          %643 = vmatpush1.bf16.msra.mxu0 0
          %644 = vmatprep.subr.bf16.mxu0 0
          %645 = vmatpush1.bf16.msra.mxu0 0
          %646 = vmatprep.subr.bf16.mxu0 0
          %647 = vmatpush1.bf16.msra.mxu0 0
          %648 = vmatprep.subr.bf16.mxu0 0
          %649 = vmatpush1.bf16.msra.mxu0 0
          %650 = vmatprep.mubr.bf16.mxu0 0
          %651 = vmatmul.mubr.bf16.gmra.mrb[0].mxu0 %v616
          %v652 = vpop.f32.mrb[0].mxu0
          %v653 = vadd.f32 %v600, %v652
          %v654 = vpop.f32.mrb[0].mxu0
          %v655 = vpop.f32.mrb[0].mxu0
          %v656 = vpop.f32.mrb[0].mxu0
          %657 = vdwg.mxu0
          %v658 = vpack.c.bf16 %v653, %v653
          %vm659 = vcmask 257024
          %660 = vst.msk [vmem:[#allocation2] sm:$0xf] %vm659, %v658
          %v662 = vunpack.c.l.b16 %v658
          %v663 = vpack.c.b16 %v662, %v662
          %664 = vrot.lane.b32.xlu0 %v663, 96
          %v665 = vpop.permute.xlu0 %664
          %667 = vst.msk [vmem:[#allocation3] sm:$0xf] %vm659, %v665
        $region96: #{tpu_custom_call.1} parent=79 // pred_fallthru
          _
        %v668 = vld [vmem:[%s576] sm:$0xff]
        %v669 = vpack.c.bf16 %v668, %v668
        %v670 = vld [vmem:[%s3] sm:$0xf]
        %v671 = vld [vmem:[%s3 + $0x4] sm:$0xf]
        %v672 = vld [vmem:[%s3 + $0x8] sm:$0xf]
        %v673 = vld [vmem:[%s3 + $0xc] sm:$0xf]
        %v674 = vld [vmem:[#allocation5] sm:$0x1]
        %v676 = vlaneseq
        %v677 = vshrl.u32 %v676, 7
        %v678 = vsub.s32 0, %v677
        %v679 = vrot.slane %v674, %v678
        %v685 = vunpack.c.l.b16 %v670
        %v686 = vunpack.c.l.b16 %v671
        %v687 = vunpack.c.l.b16 %v672
        %v688 = vunpack.c.l.b16 %v673
        %v689 = vpack.c.b16 %v686, %v685
        %v690 = vpack.c.b16 %v688, %v687
        %vm693 = vcmask 261120
        %v695 = vsel %vm693, %v669, 0
        %697 = vmatprep.subr.bf16.mxu0 0
        %698 = vmatpush1.bf16.msra.mxu0 %v689
        %699 = vmatprep.subr.bf16.mxu0 0
        %700 = vmatpush1.bf16.msra.mxu0 %v690
        %701 = vmatprep.subr.bf16.mxu0 0
        %702 = vmatpush1.bf16.msra.mxu0 0
        %703 = vmatprep.subr.bf16.mxu0 0
        %704 = vmatpush1.bf16.msra.mxu0 0
        %705 = vmatprep.subr.bf16.mxu0 0
        %706 = vmatpush1.bf16.msra.mxu0 0
        %707 = vmatprep.subr.bf16.mxu0 0
        %708 = vmatpush1.bf16.msra.mxu0 0
        %709 = vmatprep.subr.bf16.mxu0 0
        %710 = vmatpush1.bf16.msra.mxu0 0
        %711 = vmatprep.subr.bf16.mxu0 0
        %712 = vmatpush1.bf16.msra.mxu0 0
        %713 = vmatprep.subr.bf16.mxu0 0
        %714 = vmatpush1.bf16.msra.mxu0 0
        %715 = vmatprep.subr.bf16.mxu0 0
        %716 = vmatpush1.bf16.msra.mxu0 0
        %717 = vmatprep.subr.bf16.mxu0 0
        %718 = vmatpush1.bf16.msra.mxu0 0
        %719 = vmatprep.subr.bf16.mxu0 0
        %720 = vmatpush1.bf16.msra.mxu0 0
        %721 = vmatprep.subr.bf16.mxu0 0
        %722 = vmatpush1.bf16.msra.mxu0 0
        %723 = vmatprep.subr.bf16.mxu0 0
        %724 = vmatpush1.bf16.msra.mxu0 0
        %725 = vmatprep.subr.bf16.mxu0 0
        %726 = vmatpush1.bf16.msra.mxu0 0
        %727 = vmatprep.subr.bf16.mxu0 0
        %728 = vmatpush1.bf16.msra.mxu0 0
        %729 = vmatprep.mubr.bf16.mxu0 0
        %730 = vmatmul.mubr.bf16.gmra.mrb[0].mxu0 %v695
        %v731 = vpop.f32.mrb[0].mxu0
        %v732 = vadd.f32 %v679, %v731
        %v733 = vpop.f32.mrb[0].mxu0
        %v734 = vpop.f32.mrb[0].mxu0
        %v735 = vpop.f32.mrb[0].mxu0
        %736 = vdwg.mxu0
        %v737 = vpack.c.bf16 %v732, %v732
        %v738 = vld [vmem:[%s583] sm:$0x1]
        %v739 = vmul.f32 %v738, -1e+09
        %v740 = vld [vmem:[#allocation2] sm:$0xf]
        %v741 = vld [vmem:[#allocation3] sm:$0xf]
        %vm742 = vcmask 64512
        %v744 = vsel %vm742, %v737, 0
        %v747 = vsel %vm742, %v740, 0
        %749 = vmatprep.subr.bf16.mxu0 0
        %750 = vmatpush1.bf16.xpose.msra.mxu0 %v747
        %751 = vmatprep.subr.bf16.mxu0 0
        %752 = vmatpush1.bf16.xpose.msra.mxu0 0
        %753 = vmatprep.subr.bf16.mxu0 0
        %754 = vmatpush1.bf16.xpose.msra.mxu0 0
        %755 = vmatprep.subr.bf16.mxu0 0
        %756 = vmatpush1.bf16.xpose.msra.mxu0 0
        %757 = vmatprep.subr.bf16.mxu0 0
        %758 = vmatpush1.bf16.xpose.msra.mxu0 0
        %759 = vmatprep.subr.bf16.mxu0 0
        %760 = vmatpush1.bf16.xpose.msra.mxu0 0
        %761 = vmatprep.subr.bf16.mxu0 0
        %762 = vmatpush1.bf16.xpose.msra.mxu0 0
        %763 = vmatprep.subr.bf16.mxu0 0
        %764 = vmatpush1.bf16.xpose.msra.mxu0 0
        %765 = vmatprep.subr.bf16.mxu0 0
        %766 = vmatpush1.bf16.xpose.msra.mxu0 0
        %767 = vmatprep.subr.bf16.mxu0 0
        %768 = vmatpush1.bf16.xpose.msra.mxu0 0
        %769 = vmatprep.subr.bf16.mxu0 0
        %770 = vmatpush1.bf16.xpose.msra.mxu0 0
        %771 = vmatprep.subr.bf16.mxu0 0
        %772 = vmatpush1.bf16.xpose.msra.mxu0 0
        %773 = vmatprep.subr.bf16.mxu0 0
        %774 = vmatpush1.bf16.xpose.msra.mxu0 0
        %775 = vmatprep.subr.bf16.mxu0 0
        %776 = vmatpush1.bf16.xpose.msra.mxu0 0
        %777 = vmatprep.subr.bf16.mxu0 0
        %778 = vmatpush1.bf16.xpose.msra.mxu0 0
        %779 = vmatprep.subr.bf16.mxu0 0
        %780 = vmatpush1.bf16.xpose.msra.mxu0 0
        %781 = vmatprep.mubr.bf16.mxu0 0
        %782 = vmatmul.mubr.bf16.gmra.mrb[0].mxu0 %v744
        %v783 = vpop.f32.mrb[0].mxu0
        %v784 = vadd.f32 0.0, %v783
        %v785 = vpop.f32.mrb[0].mxu0
        %v786 = vpop.f32.mrb[0].mxu0
        %v787 = vpop.f32.mrb[0].mxu0
        %788 = vdwg.mxu0
        %v789 = vmul.f32 %v784, 0.35355338
        %v791 = vlaneseq
        %v792 = vshrl.u32 %v791, 7
        %v793 = vsub.s32 0, %v792
        %v794 = vrot.slane %v739, %v793
        %v796 = vadd.f32 %v789, %v794
        %v797 = vsel %vm742, %v796, -inf
        %798 = vmax.xlane.f32.xlu0 %v797
        %v799 = vpop.xlane.xlu0 %798
        %v800 = vsub.f32 %v796, %v799
        %v801 = vmul.f32 %v800, 1.442695
        %v802 = vpow.pop %v801
        %v803 = vsel %vm742, %v802, 0.0
        %804 = vadd.xlane.f32.xlu0 %v803
        %v805 = vpop.xlane.xlu0 %804
        %v806 = vrcp.pop %v805
        %v807 = vmul.f32 %v802, %v806
        %v808 = vpack.c.bf16 %v807, %v807
        %v810 = vsel %vm742, %v808, 0
        %vm812 = vcmask 1043456
        %v814 = vsel %vm812, %v741, 0
        %816 = vmatprep.subr.bf16.mxu0 0
        %817 = vmatpush1.bf16.msra.mxu0 %v814
        %818 = vmatprep.subr.bf16.mxu0 0
        %819 = vmatpush1.bf16.msra.mxu0 0
        %820 = vmatprep.subr.bf16.mxu0 0
        %821 = vmatpush1.bf16.msra.mxu0 0
        %822 = vmatprep.subr.bf16.mxu0 0
        %823 = vmatpush1.bf16.msra.mxu0 0
        %824 = vmatprep.subr.bf16.mxu0 0
        %825 = vmatpush1.bf16.msra.mxu0 0
        %826 = vmatprep.subr.bf16.mxu0 0
        %827 = vmatpush1.bf16.msra.mxu0 0
        %828 = vmatprep.subr.bf16.mxu0 0
        %829 = vmatpush1.bf16.msra.mxu0 0
        %830 = vmatprep.subr.bf16.mxu0 0
        %831 = vmatpush1.bf16.msra.mxu0 0
        %832 = vmatprep.subr.bf16.mxu0 0
        %833 = vmatpush1.bf16.msra.mxu0 0
        %834 = vmatprep.subr.bf16.mxu0 0
        %835 = vmatpush1.bf16.msra.mxu0 0
        %836 = vmatprep.subr.bf16.mxu0 0
        %837 = vmatpush1.bf16.msra.mxu0 0
        %838 = vmatprep.subr.bf16.mxu0 0
        %839 = vmatpush1.bf16.msra.mxu0 0
        %840 = vmatprep.subr.bf16.mxu0 0
        %841 = vmatpush1.bf16.msra.mxu0 0
        %842 = vmatprep.subr.bf16.mxu0 0
        %843 = vmatpush1.bf16.msra.mxu0 0
        %844 = vmatprep.subr.bf16.mxu0 0
        %845 = vmatpush1.bf16.msra.mxu0 0
        %846 = vmatprep.subr.bf16.mxu0 0
        %847 = vmatpush1.bf16.msra.mxu0 0
        %848 = vmatprep.mubr.bf16.mxu0 0
        %849 = vmatmul.mubr.bf16.gmra.mrb[0].mxu0 %v810
        %v850 = vpop.f32.mrb[0].mxu0
        %v851 = vadd.f32 0.0, %v850
        %v852 = vpop.f32.mrb[0].mxu0
        %v853 = vpop.f32.mrb[0].mxu0
        %v854 = vpop.f32.mrb[0].mxu0
        %855 = vdwg.mxu0
        %v856 = vpack.c.bf16 %v851, %v851
        %vm857 = vcmask 60416
        %858 = vst.msk [vmem:[#allocation4] sm:$0xf] %vm857, %v856
        %860 = vrot.lane.b32.xlu0 %v737, 120
        %v861 = vpop.permute.xlu0 %860
        %v863 = vunpack.c.l.b16 %v740
        %v864 = vpack.c.b16 %v863, %v863
        %865 = vrot.lane.b32.xlu0 %v864, 120
        %v866 = vpop.permute.xlu0 %865
        %v868 = vsel %vm742, %v861, 0
        %v871 = vsel %vm742, %v866, 0
        %873 = vmatprep.subr.bf16.mxu0 0
        %874 = vmatpush1.bf16.xpose.msra.mxu0 %v871
        %875 = vmatprep.subr.bf16.mxu0 0
        %876 = vmatpush1.bf16.xpose.msra.mxu0 0
        %877 = vmatprep.subr.bf16.mxu0 0
        %878 = vmatpush1.bf16.xpose.msra.mxu0 0
        %879 = vmatprep.subr.bf16.mxu0 0
        %880 = vmatpush1.bf16.xpose.msra.mxu0 0
        %881 = vmatprep.subr.bf16.mxu0 0
        %882 = vmatpush1.bf16.xpose.msra.mxu0 0
        %883 = vmatprep.subr.bf16.mxu0 0
        %884 = vmatpush1.bf16.xpose.msra.mxu0 0
        %885 = vmatprep.subr.bf16.mxu0 0
        %886 = vmatpush1.bf16.xpose.msra.mxu0 0
        %887 = vmatprep.subr.bf16.mxu0 0
        %888 = vmatpush1.bf16.xpose.msra.mxu0 0
        %889 = vmatprep.subr.bf16.mxu0 0
        %890 = vmatpush1.bf16.xpose.msra.mxu0 0
        %891 = vmatprep.subr.bf16.mxu0 0
        %892 = vmatpush1.bf16.xpose.msra.mxu0 0
        %893 = vmatprep.subr.bf16.mxu0 0
        %894 = vmatpush1.bf16.xpose.msra.mxu0 0
        %895 = vmatprep.subr.bf16.mxu0 0
        %896 = vmatpush1.bf16.xpose.msra.mxu0 0
        %897 = vmatprep.subr.bf16.mxu0 0
        %898 = vmatpush1.bf16.xpose.msra.mxu0 0
        %899 = vmatprep.subr.bf16.mxu0 0
        %900 = vmatpush1.bf16.xpose.msra.mxu0 0
        %901 = vmatprep.subr.bf16.mxu0 0
        %902 = vmatpush1.bf16.xpose.msra.mxu0 0
        %903 = vmatprep.subr.bf16.mxu0 0
        %904 = vmatpush1.bf16.xpose.msra.mxu0 0
        %905 = vmatprep.mubr.bf16.mxu0 0
        %906 = vmatmul.mubr.bf16.gmra.mrb[0].mxu0 %v868
        %v907 = vpop.f32.mrb[0].mxu0
        %v908 = vadd.f32 0.0, %v907
        %v909 = vpop.f32.mrb[0].mxu0
        %v910 = vpop.f32.mrb[0].mxu0
        %v911 = vpop.f32.mrb[0].mxu0
        %912 = vdwg.mxu0
        %v913 = vmul.f32 %v908, 0.35355338
        %v914 = vadd.f32 %v913, %v794
        %v915 = vsel %vm742, %v914, -inf
        %916 = vmax.xlane.f32.xlu0 %v915
        %v917 = vpop.xlane.xlu0 %916
        %v918 = vsub.f32 %v914, %v917
        %v919 = vmul.f32 %v918, 1.442695
        %v920 = vpow.pop %v919
        %v921 = vsel %vm742, %v920, 0.0
        %922 = vadd.xlane.f32.xlu0 %v921
        %v923 = vpop.xlane.xlu0 %922
        %v924 = vrcp.pop %v923
        %v925 = vmul.f32 %v920, %v924
        %v926 = vpack.c.bf16 %v925, %v925
        %v928 = vunpack.c.l.b16 %v741
        %v929 = vpack.c.b16 %v928, %v928
        %930 = vrot.lane.b32.xlu0 %v929, 120
        %v931 = vpop.permute.xlu0 %930
        %v933 = vsel %vm742, %v926, 0
        %v936 = vsel %vm812, %v931, 0
        %938 = vmatprep.subr.bf16.mxu0 0
        %939 = vmatpush1.bf16.msra.mxu0 %v936
        %940 = vmatprep.subr.bf16.mxu0 0
        %941 = vmatpush1.bf16.msra.mxu0 0
        %942 = vmatprep.subr.bf16.mxu0 0
        %943 = vmatpush1.bf16.msra.mxu0 0
        %944 = vmatprep.subr.bf16.mxu0 0
        %945 = vmatpush1.bf16.msra.mxu0 0
        %946 = vmatprep.subr.bf16.mxu0 0
        %947 = vmatpush1.bf16.msra.mxu0 0
        %948 = vmatprep.subr.bf16.mxu0 0
        %949 = vmatpush1.bf16.msra.mxu0 0
        %950 = vmatprep.subr.bf16.mxu0 0
        %951 = vmatpush1.bf16.msra.mxu0 0
        %952 = vmatprep.subr.bf16.mxu0 0
        %953 = vmatpush1.bf16.msra.mxu0 0
        %954 = vmatprep.subr.bf16.mxu0 0
        %955 = vmatpush1.bf16.msra.mxu0 0
        %956 = vmatprep.subr.bf16.mxu0 0
        %957 = vmatpush1.bf16.msra.mxu0 0
        %958 = vmatprep.subr.bf16.mxu0 0
        %959 = vmatpush1.bf16.msra.mxu0 0
        %960 = vmatprep.subr.bf16.mxu0 0
        %961 = vmatpush1.bf16.msra.mxu0 0
        %962 = vmatprep.subr.bf16.mxu0 0
        %963 = vmatpush1.bf16.msra.mxu0 0
        %964 = vmatprep.subr.bf16.mxu0 0
        %965 = vmatpush1.bf16.msra.mxu0 0
        %966 = vmatprep.subr.bf16.mxu0 0
        %967 = vmatpush1.bf16.msra.mxu0 0
        %968 = vmatprep.subr.bf16.mxu0 0
        %969 = vmatpush1.bf16.msra.mxu0 0
        %970 = vmatprep.mubr.bf16.mxu0 0
        %971 = vmatmul.mubr.bf16.gmra.mrb[0].mxu0 %v933
        %v972 = vpop.f32.mrb[0].mxu0
        %v973 = vadd.f32 0.0, %v972
        %v974 = vpop.f32.mrb[0].mxu0
        %v975 = vpop.f32.mrb[0].mxu0
        %v976 = vpop.f32.mrb[0].mxu0
        %977 = vdwg.mxu0
        %v978 = vpack.c.bf16 %v973, %v973
        %v980 = vunpack.c.l.b16 %v978
        %v981 = vpack.c.b16 %v980, %v980
        %982 = vrot.lane.b32.xlu0 %v981, 8
        %v983 = vpop.permute.xlu0 %982
        %vm985 = vcmask 126016
        %986 = vst.msk [vmem:[#allocation4] sm:$0xf] %vm985, %v983
        %987 = vrot.lane.b32.xlu0 %v737, 112
        %v988 = vpop.permute.xlu0 %987
        %989 = vrot.lane.b32.xlu0 %v864, 112
        %v990 = vpop.permute.xlu0 %989
        %v992 = vsel %vm742, %v988, 0
        %v995 = vsel %vm742, %v990, 0
        %997 = vmatprep.subr.bf16.mxu0 0
        %998 = vmatpush1.bf16.xpose.msra.mxu0 %v995
        %999 = vmatprep.subr.bf16.mxu0 0
        %1000 = vmatpush1.bf16.xpose.msra.mxu0 0
        %1001 = vmatprep.subr.bf16.mxu0 0
        %1002 = vmatpush1.bf16.xpose.msra.mxu0 0
        %1003 = vmatprep.subr.bf16.mxu0 0
        %1004 = vmatpush1.bf16.xpose.msra.mxu0 0
        %1005 = vmatprep.subr.bf16.mxu0 0
        %1006 = vmatpush1.bf16.xpose.msra.mxu0 0
        %1007 = vmatprep.subr.bf16.mxu0 0
        %1008 = vmatpush1.bf16.xpose.msra.mxu0 0
        %1009 = vmatprep.subr.bf16.mxu0 0
        %1010 = vmatpush1.bf16.xpose.msra.mxu0 0
        %1011 = vmatprep.subr.bf16.mxu0 0
        %1012 = vmatpush1.bf16.xpose.msra.mxu0 0
        %1013 = vmatprep.subr.bf16.mxu0 0
        %1014 = vmatpush1.bf16.xpose.msra.mxu0 0
        %1015 = vmatprep.subr.bf16.mxu0 0
        %1016 = vmatpush1.bf16.xpose.msra.mxu0 0
        %1017 = vmatprep.subr.bf16.mxu0 0
        %1018 = vmatpush1.bf16.xpose.msra.mxu0 0
        %1019 = vmatprep.subr.bf16.mxu0 0
        %1020 = vmatpush1.bf16.xpose.msra.mxu0 0
        %1021 = vmatprep.subr.bf16.mxu0 0
        %1022 = vmatpush1.bf16.xpose.msra.mxu0 0
        %1023 = vmatprep.subr.bf16.mxu0 0
        %1024 = vmatpush1.bf16.xpose.msra.mxu0 0
        %1025 = vmatprep.subr.bf16.mxu0 0
        %1026 = vmatpush1.bf16.xpose.msra.mxu0 0
        %1027 = vmatprep.subr.bf16.mxu0 0
        %1028 = vmatpush1.bf16.xpose.msra.mxu0 0
        %1029 = vmatprep.mubr.bf16.mxu0 0
        %1030 = vmatmul.mubr.bf16.gmra.mrb[0].mxu0 %v992
        %v1031 = vpop.f32.mrb[0].mxu0
        %v1032 = vadd.f32 0.0, %v1031
        %v1033 = vpop.f32.mrb[0].mxu0
        %v1034 = vpop.f32.mrb[0].mxu0
        %v1035 = vpop.f32.mrb[0].mxu0
        %1036 = vdwg.mxu0
        %v1037 = vmul.f32 %v1032, 0.35355338
        %v1038 = vadd.f32 %v1037, %v794
        %v1039 = vsel %vm742, %v1038, -inf
        %1040 = vmax.xlane.f32.xlu0 %v1039
        %v1041 = vpop.xlane.xlu0 %1040
        %v1042 = vsub.f32 %v1038, %v1041
        %v1043 = vmul.f32 %v1042, 1.442695
        %v1044 = vpow.pop %v1043
        %v1045 = vsel %vm742, %v1044, 0.0
        %1046 = vadd.xlane.f32.xlu0 %v1045
        %v1047 = vpop.xlane.xlu0 %1046
        %v1048 = vrcp.pop %v1047
        %v1049 = vmul.f32 %v1044, %v1048
        %v1050 = vpack.c.bf16 %v1049, %v1049
        %1051 = vrot.lane.b32.xlu0 %v929, 112
        %v1052 = vpop.permute.xlu0 %1051
        %v1054 = vsel %vm742, %v1050, 0
        %v1057 = vsel %vm812, %v1052, 0
        %1059 = vmatprep.subr.bf16.mxu0 0
        %1060 = vmatpush1.bf16.msra.mxu0 %v1057
        %1061 = vmatprep.subr.bf16.mxu0 0
        %1062 = vmatpush1.bf16.msra.mxu0 0
        %1063 = vmatprep.subr.bf16.mxu0 0
        %1064 = vmatpush1.bf16.msra.mxu0 0
        %1065 = vmatprep.subr.bf16.mxu0 0
        %1066 = vmatpush1.bf16.msra.mxu0 0
        %1067 = vmatprep.subr.bf16.mxu0 0
        %1068 = vmatpush1.bf16.msra.mxu0 0
        %1069 = vmatprep.subr.bf16.mxu0 0
        %1070 = vmatpush1.bf16.msra.mxu0 0
        %1071 = vmatprep.subr.bf16.mxu0 0
        %1072 = vmatpush1.bf16.msra.mxu0 0
        %1073 = vmatprep.subr.bf16.mxu0 0
        %1074 = vmatpush1.bf16.msra.mxu0 0
        %1075 = vmatprep.subr.bf16.mxu0 0
        %1076 = vmatpush1.bf16.msra.mxu0 0
        %1077 = vmatprep.subr.bf16.mxu0 0
        %1078 = vmatpush1.bf16.msra.mxu0 0
        %1079 = vmatprep.subr.bf16.mxu0 0
        %1080 = vmatpush1.bf16.msra.mxu0 0
        %1081 = vmatprep.subr.bf16.mxu0 0
        %1082 = vmatpush1.bf16.msra.mxu0 0
        %1083 = vmatprep.subr.bf16.mxu0 0
        %1084 = vmatpush1.bf16.msra.mxu0 0
        %1085 = vmatprep.subr.bf16.mxu0 0
        %1086 = vmatpush1.bf16.msra.mxu0 0
        %1087 = vmatprep.subr.bf16.mxu0 0
        %1088 = vmatpush1.bf16.msra.mxu0 0
        %1089 = vmatprep.subr.bf16.mxu0 0
        %1090 = vmatpush1.bf16.msra.mxu0 0
        %1091 = vmatprep.mubr.bf16.mxu0 0
        %1092 = vmatmul.mubr.bf16.gmra.mrb[0].mxu0 %v1054
        %v1093 = vpop.f32.mrb[0].mxu0
        %v1094 = vadd.f32 0.0, %v1093
        %v1095 = vpop.f32.mrb[0].mxu0
        %v1096 = vpop.f32.mrb[0].mxu0
        %v1097 = vpop.f32.mrb[0].mxu0
        %1098 = vdwg.mxu0
        %v1099 = vpack.c.bf16 %v1094, %v1094
        %v1101 = vunpack.c.l.b16 %v1099
        %v1102 = vpack.c.b16 %v1101, %v1101
        %1103 = vrot.lane.b32.xlu0 %v1102, 16
        %v1104 = vpop.permute.xlu0 %1103
        %vm1106 = vcmask 191616
        %1107 = vst.msk [vmem:[#allocation4] sm:$0xf] %vm1106, %v1104
        %1108 = vrot.lane.b32.xlu0 %v737, 104
        %v1109 = vpop.permute.xlu0 %1108
        %1110 = vrot.lane.b32.xlu0 %v864, 104
        %v1111 = vpop.permute.xlu0 %1110
        %v1113 = vsel %vm742, %v1109, 0
        %v1116 = vsel %vm742, %v1111, 0
        %1118 = vmatprep.subr.bf16.mxu0 0
        %1119 = vmatpush1.bf16.xpose.msra.mxu0 %v1116
        %1120 = vmatprep.subr.bf16.mxu0 0
        %1121 = vmatpush1.bf16.xpose.msra.mxu0 0
        %1122 = vmatprep.subr.bf16.mxu0 0
        %1123 = vmatpush1.bf16.xpose.msra.mxu0 0
        %1124 = vmatprep.subr.bf16.mxu0 0
        %1125 = vmatpush1.bf16.xpose.msra.mxu0 0
        %1126 = vmatprep.subr.bf16.mxu0 0
        %1127 = vmatpush1.bf16.xpose.msra.mxu0 0
        %1128 = vmatprep.subr.bf16.mxu0 0
        %1129 = vmatpush1.bf16.xpose.msra.mxu0 0
        %1130 = vmatprep.subr.bf16.mxu0 0
        %1131 = vmatpush1.bf16.xpose.msra.mxu0 0
        %1132 = vmatprep.subr.bf16.mxu0 0
        %1133 = vmatpush1.bf16.xpose.msra.mxu0 0
        %1134 = vmatprep.subr.bf16.mxu0 0
        %1135 = vmatpush1.bf16.xpose.msra.mxu0 0
        %1136 = vmatprep.subr.bf16.mxu0 0
        %1137 = vmatpush1.bf16.xpose.msra.mxu0 0
        %1138 = vmatprep.subr.bf16.mxu0 0
        %1139 = vmatpush1.bf16.xpose.msra.mxu0 0
        %1140 = vmatprep.subr.bf16.mxu0 0
        %1141 = vmatpush1.bf16.xpose.msra.mxu0 0
        %1142 = vmatprep.subr.bf16.mxu0 0
        %1143 = vmatpush1.bf16.xpose.msra.mxu0 0
        %1144 = vmatprep.subr.bf16.mxu0 0
        %1145 = vmatpush1.bf16.xpose.msra.mxu0 0
        %1146 = vmatprep.subr.bf16.mxu0 0
        %1147 = vmatpush1.bf16.xpose.msra.mxu0 0
        %1148 = vmatprep.subr.bf16.mxu0 0
        %1149 = vmatpush1.bf16.xpose.msra.mxu0 0
        %1150 = vmatprep.mubr.bf16.mxu0 0
        %1151 = vmatmul.mubr.bf16.gmra.mrb[0].mxu0 %v1113
        %v1152 = vpop.f32.mrb[0].mxu0
        %v1153 = vadd.f32 0.0, %v1152
        %v1154 = vpop.f32.mrb[0].mxu0
        %v1155 = vpop.f32.mrb[0].mxu0
        %v1156 = vpop.f32.mrb[0].mxu0
        %1157 = vdwg.mxu0
        %v1158 = vmul.f32 %v1153, 0.35355338
        %v1159 = vadd.f32 %v1158, %v794
        %v1160 = vsel %vm742, %v1159, -inf
        %1161 = vmax.xlane.f32.xlu0 %v1160
        %v1162 = vpop.xlane.xlu0 %1161
        %v1163 = vsub.f32 %v1159, %v1162
        %v1164 = vmul.f32 %v1163, 1.442695
        %v1165 = vpow.pop %v1164
        %v1166 = vsel %vm742, %v1165, 0.0
        %1167 = vadd.xlane.f32.xlu0 %v1166
        %v1168 = vpop.xlane.xlu0 %1167
        %v1169 = vrcp.pop %v1168
        %v1170 = vmul.f32 %v1165, %v1169
        %v1171 = vpack.c.bf16 %v1170, %v1170
        %1172 = vrot.lane.b32.xlu0 %v929, 104
        %v1173 = vpop.permute.xlu0 %1172
        %v1175 = vsel %vm742, %v1171, 0
        %v1178 = vsel %vm812, %v1173, 0
        %1180 = vmatprep.subr.bf16.mxu0 0
        %1181 = vmatpush1.bf16.msra.mxu0 %v1178
        %1182 = vmatprep.subr.bf16.mxu0 0
        %1183 = vmatpush1.bf16.msra.mxu0 0
        %1184 = vmatprep.subr.bf16.mxu0 0
        %1185 = vmatpush1.bf16.msra.mxu0 0
        %1186 = vmatprep.subr.bf16.mxu0 0
        %1187 = vmatpush1.bf16.msra.mxu0 0
        %1188 = vmatprep.subr.bf16.mxu0 0
        %1189 = vmatpush1.bf16.msra.mxu0 0
        %1190 = vmatprep.subr.bf16.mxu0 0
        %1191 = vmatpush1.bf16.msra.mxu0 0
        %1192 = vmatprep.subr.bf16.mxu0 0
        %1193 = vmatpush1.bf16.msra.mxu0 0
        %1194 = vmatprep.subr.bf16.mxu0 0
        %1195 = vmatpush1.bf16.msra.mxu0 0
        %1196 = vmatprep.subr.bf16.mxu0 0
        %1197 = vmatpush1.bf16.msra.mxu0 0
        %1198 = vmatprep.subr.bf16.mxu0 0
        %1199 = vmatpush1.bf16.msra.mxu0 0
        %1200 = vmatprep.subr.bf16.mxu0 0
        %1201 = vmatpush1.bf16.msra.mxu0 0
        %1202 = vmatprep.subr.bf16.mxu0 0
        %1203 = vmatpush1.bf16.msra.mxu0 0
        %1204 = vmatprep.subr.bf16.mxu0 0
        %1205 = vmatpush1.bf16.msra.mxu0 0
        %1206 = vmatprep.subr.bf16.mxu0 0
        %1207 = vmatpush1.bf16.msra.mxu0 0
        %1208 = vmatprep.subr.bf16.mxu0 0
        %1209 = vmatpush1.bf16.msra.mxu0 0
        %1210 = vmatprep.subr.bf16.mxu0 0
        %1211 = vmatpush1.bf16.msra.mxu0 0
        %1212 = vmatprep.mubr.bf16.mxu0 0
        %1213 = vmatmul.mubr.bf16.gmra.mrb[0].mxu0 %v1175
        %v1214 = vpop.f32.mrb[0].mxu0
        %v1215 = vadd.f32 0.0, %v1214
        %v1216 = vpop.f32.mrb[0].mxu0
        %v1217 = vpop.f32.mrb[0].mxu0
        %v1218 = vpop.f32.mrb[0].mxu0
        %1219 = vdwg.mxu0
        %v1220 = vpack.c.bf16 %v1215, %v1215
        %v1222 = vunpack.c.l.b16 %v1220
        %v1223 = vpack.c.b16 %v1222, %v1222
        %1224 = vrot.lane.b32.xlu0 %v1223, 24
        %v1225 = vpop.permute.xlu0 %1224
        %vm1227 = vcmask 257216
        %1228 = vst.msk [vmem:[#allocation4] sm:$0xf] %vm1227, %v1225
        %v1229 = vld [vmem:[#allocation4] sm:$0xf]
        %v1230 = vld [vmem:[%s7] sm:$0xf]
        %v1231 = vld [vmem:[%s7 + $0x4] sm:$0xf]
        %v1232 = vld [vmem:[%s7 + $0x8] sm:$0xf]
        %v1233 = vld [vmem:[%s7 + $0xc] sm:$0xf]
        %v1234 = vld [vmem:[#allocation10] sm:$0x1]
        %v1236 = vlaneseq
        %v1237 = vshrl.u32 %v1236, 7
        %v1238 = vsub.s32 0, %v1237
        %v1239 = vrot.slane %v1234, %v1238
        %v1245 = vunpack.c.l.b16 %v1230
        %v1246 = vunpack.c.l.b16 %v1231
        %v1247 = vunpack.c.l.b16 %v1232
        %v1248 = vunpack.c.l.b16 %v1233
        %v1249 = vpack.c.b16 %v1246, %v1245
        %v1250 = vpack.c.b16 %v1248, %v1247
        %v1254 = vsel %vm693, %v1229, 0
        %1256 = vmatprep.subr.bf16.mxu0 0
        %1257 = vmatpush1.bf16.msra.mxu0 %v1249
        %1258 = vmatprep.subr.bf16.mxu0 0
        %1259 = vmatpush1.bf16.msra.mxu0 %v1250
        %1260 = vmatprep.subr.bf16.mxu0 0
        %1261 = vmatpush1.bf16.msra.mxu0 0
        %1262 = vmatprep.subr.bf16.mxu0 0
        %1263 = vmatpush1.bf16.msra.mxu0 0
        %1264 = vmatprep.subr.bf16.mxu0 0
        %1265 = vmatpush1.bf16.msra.mxu0 0
        %1266 = vmatprep.subr.bf16.mxu0 0
        %1267 = vmatpush1.bf16.msra.mxu0 0
        %1268 = vmatprep.subr.bf16.mxu0 0
        %1269 = vmatpush1.bf16.msra.mxu0 0
        %1270 = vmatprep.subr.bf16.mxu0 0
        %1271 = vmatpush1.bf16.msra.mxu0 0
        %1272 = vmatprep.subr.bf16.mxu0 0
        %1273 = vmatpush1.bf16.msra.mxu0 0
        %1274 = vmatprep.subr.bf16.mxu0 0
        %1275 = vmatpush1.bf16.msra.mxu0 0
        %1276 = vmatprep.subr.bf16.mxu0 0
        %1277 = vmatpush1.bf16.msra.mxu0 0
        %1278 = vmatprep.subr.bf16.mxu0 0
        %1279 = vmatpush1.bf16.msra.mxu0 0
        %1280 = vmatprep.subr.bf16.mxu0 0
        %1281 = vmatpush1.bf16.msra.mxu0 0
        %1282 = vmatprep.subr.bf16.mxu0 0
        %1283 = vmatpush1.bf16.msra.mxu0 0
        %1284 = vmatprep.subr.bf16.mxu0 0
        %1285 = vmatpush1.bf16.msra.mxu0 0
        %1286 = vmatprep.subr.bf16.mxu0 0
        %1287 = vmatpush1.bf16.msra.mxu0 0
        %1288 = vmatprep.mubr.bf16.mxu0 0
        %1289 = vmatmul.mubr.bf16.gmra.mrb[0].mxu0 %v1254
        %v1290 = vpop.f32.mrb[0].mxu0
        %v1291 = vadd.f32 %v1239, %v1290
        %v1292 = vpop.f32.mrb[0].mxu0
        %v1293 = vpop.f32.mrb[0].mxu0
        %v1294 = vpop.f32.mrb[0].mxu0
        %1295 = vdwg.mxu0
        %v1296 = vadd.f32 %v668, %v1291
        %v1297 = vld [vmem:[%s13] sm:$0x1]
        %v1298 = vld [vmem:[%s14] sm:$0x1]
        %v1299 = vsel %vm693, %v1296, 0.0
        %1300 = vadd.xlane.f32.xlu0 %v1299
        %v1301 = vpop.xlane.xlu0 %1300
        %v1302 = vrcp.pop 32.0
        %v1303 = vmul.f32 %v1301, %v1302
        %v1304 = vsub.f32 %v1296, %v1303
        %v1305 = vmul.f32 %v1304, %v1304
        %v1306 = vsel %vm693, %v1305, 0.0
        %1307 = vadd.xlane.f32.xlu0 %v1306
        %v1308 = vpop.xlane.xlu0 %1307
        %v1309 = vmul.f32 %v1308, %v1302
        %v1310 = vadd.f32 %v1309, 1e-05
        %v1311 = vrsqrt.pop %v1310
        %v1312 = vmul.f32 %v1304, %v1311
        %v1314 = vlaneseq
        %v1315 = vshrl.u32 %v1314, 7
        %v1316 = vsub.s32 0, %v1315
        %v1317 = vrot.slane %v1297, %v1316
        %v1319 = vmul.f32 %v1312, %v1317
        %v1321 = vlaneseq
        %v1322 = vshrl.u32 %v1321, 7
        %v1323 = vsub.s32 0, %v1322
        %v1324 = vrot.slane %v1298, %v1323
        %v1326 = vadd.f32 %v1319, %v1324
        %v1327 = vpack.c.bf16 %v1326, %v1326
        %v1328 = vld [vmem:[%s9] sm:$0xf]
        %v1329 = vld [vmem:[%s9 + $0x4] sm:$0xf]
        %v1330 = vld [vmem:[%s9 + $0x8] sm:$0xf]
        %v1331 = vld [vmem:[%s9 + $0xc] sm:$0xf]
        %v1332 = vld [vmem:[%s10] sm:$0x1]
        %v1334 = vlaneseq
        %v1335 = vshrl.u32 %v1334, 7
        %v1336 = vsub.s32 0, %v1335
        %v1337 = vrot.slane %v1332, %v1336
        %v1343 = vunpack.c.l.b16 %v1328
        %v1344 = vunpack.c.l.b16 %v1329
        %v1345 = vunpack.c.l.b16 %v1330
        %v1346 = vunpack.c.l.b16 %v1331
        %v1347 = vpack.c.b16 %v1344, %v1343
        %v1348 = vpack.c.b16 %v1346, %v1345
        %v1352 = vsel %vm693, %v1327, 0
        %1354 = vmatprep.subr.bf16.mxu0 0
        %1355 = vmatpush1.bf16.msra.mxu0 %v1347
        %1356 = vmatprep.subr.bf16.mxu0 0
        %1357 = vmatpush1.bf16.msra.mxu0 %v1348
        %1358 = vmatprep.subr.bf16.mxu0 0
        %1359 = vmatpush1.bf16.msra.mxu0 0
        %1360 = vmatprep.subr.bf16.mxu0 0
        %1361 = vmatpush1.bf16.msra.mxu0 0
        %1362 = vmatprep.subr.bf16.mxu0 0
        %1363 = vmatpush1.bf16.msra.mxu0 0
        %1364 = vmatprep.subr.bf16.mxu0 0
        %1365 = vmatpush1.bf16.msra.mxu0 0
        %1366 = vmatprep.subr.bf16.mxu0 0
        %1367 = vmatpush1.bf16.msra.mxu0 0
        %1368 = vmatprep.subr.bf16.mxu0 0
        %1369 = vmatpush1.bf16.msra.mxu0 0
        %1370 = vmatprep.subr.bf16.mxu0 0
        %1371 = vmatpush1.bf16.msra.mxu0 0
        %1372 = vmatprep.subr.bf16.mxu0 0
        %1373 = vmatpush1.bf16.msra.mxu0 0
        %1374 = vmatprep.subr.bf16.mxu0 0
        %1375 = vmatpush1.bf16.msra.mxu0 0
        %1376 = vmatprep.subr.bf16.mxu0 0
        %1377 = vmatpush1.bf16.msra.mxu0 0
        %1378 = vmatprep.subr.bf16.mxu0 0
        %1379 = vmatpush1.bf16.msra.mxu0 0
        %1380 = vmatprep.subr.bf16.mxu0 0
        %1381 = vmatpush1.bf16.msra.mxu0 0
        %1382 = vmatprep.subr.bf16.mxu0 0
        %1383 = vmatpush1.bf16.msra.mxu0 0
        %1384 = vmatprep.subr.bf16.mxu0 0
        %1385 = vmatpush1.bf16.msra.mxu0 0
        %1386 = vmatprep.mubr.bf16.mxu0 0
        %1387 = vmatmul.mubr.bf16.gmra.mrb[0].mxu0 %v1352
        %v1388 = vpop.f32.mrb[0].mxu0
        %v1389 = vadd.f32 %v1337, %v1388
        %v1390 = vpop.f32.mrb[0].mxu0
        %v1391 = vpop.f32.mrb[0].mxu0
        %v1392 = vpop.f32.mrb[0].mxu0
        %1393 = vdwg.mxu0
        %v1394 = vmax.f32 %v1389, 0.0
        %v1395 = vpack.c.bf16 %v1394, %v1394
        %v1396 = vld [vmem:[%s11] sm:$0xf]
        %v1397 = vld [vmem:[%s11 + $0x4] sm:$0xf]
        %v1398 = vld [vmem:[%s11 + $0x8] sm:$0xf]
        %v1399 = vld [vmem:[%s11 + $0xc] sm:$0xf]
        %v1400 = vld [vmem:[%s11 + $0x10] sm:$0xf]
        %v1401 = vld [vmem:[%s11 + $0x14] sm:$0xf]
        %v1402 = vld [vmem:[%s11 + $0x18] sm:$0xf]
        %v1403 = vld [vmem:[%s11 + $0x1c] sm:$0xf]
        %v1404 = vld [vmem:[%s11 + $0x20] sm:$0xf]
        %v1405 = vld [vmem:[%s11 + $0x24] sm:$0xf]
        %v1406 = vld [vmem:[%s11 + $0x28] sm:$0xf]
        %v1407 = vld [vmem:[%s11 + $0x2c] sm:$0xf]
        %v1408 = vld [vmem:[%s11 + $0x30] sm:$0xf]
        %v1409 = vld [vmem:[%s11 + $0x34] sm:$0xf]
        %v1410 = vld [vmem:[%s11 + $0x38] sm:$0xf]
        %v1411 = vld [vmem:[%s11 + $0x3c] sm:$0xf]
        %v1412 = vld [vmem:[%s12] sm:$0x1]
        %v1414 = vlaneseq
        %v1415 = vshrl.u32 %v1414, 7
        %v1416 = vsub.s32 0, %v1415
        %v1417 = vrot.slane %v1412, %v1416
        %v1435 = vunpack.c.l.b16 %v1396
        %v1436 = vunpack.c.l.b16 %v1397
        %v1437 = vunpack.c.l.b16 %v1398
        %v1438 = vunpack.c.l.b16 %v1399
        %v1439 = vunpack.c.l.b16 %v1400
        %v1440 = vunpack.c.l.b16 %v1401
        %v1441 = vunpack.c.l.b16 %v1402
        %v1442 = vunpack.c.l.b16 %v1403
        %v1443 = vunpack.c.l.b16 %v1404
        %v1444 = vunpack.c.l.b16 %v1405
        %v1445 = vunpack.c.l.b16 %v1406
        %v1446 = vunpack.c.l.b16 %v1407
        %v1447 = vunpack.c.l.b16 %v1408
        %v1448 = vunpack.c.l.b16 %v1409
        %v1449 = vunpack.c.l.b16 %v1410
        %v1450 = vunpack.c.l.b16 %v1411
        %v1451 = vpack.c.b16 %v1436, %v1435
        %v1452 = vpack.c.b16 %v1438, %v1437
        %v1453 = vpack.c.b16 %v1440, %v1439
        %v1454 = vpack.c.b16 %v1442, %v1441
        %v1455 = vpack.c.b16 %v1444, %v1443
        %v1456 = vpack.c.b16 %v1446, %v1445
        %v1457 = vpack.c.b16 %v1448, %v1447
        %v1458 = vpack.c.b16 %v1450, %v1449
        %1467 = vmatprep.subr.bf16.mxu0 0
        %1468 = vmatpush1.bf16.msra.mxu0 %v1451
        %1469 = vmatprep.subr.bf16.mxu0 0
        %1470 = vmatpush1.bf16.msra.mxu0 %v1452
        %1471 = vmatprep.subr.bf16.mxu0 0
        %1472 = vmatpush1.bf16.msra.mxu0 %v1453
        %1473 = vmatprep.subr.bf16.mxu0 0
        %1474 = vmatpush1.bf16.msra.mxu0 %v1454
        %1475 = vmatprep.subr.bf16.mxu0 0
        %1476 = vmatpush1.bf16.msra.mxu0 %v1455
        %1477 = vmatprep.subr.bf16.mxu0 0
        %1478 = vmatpush1.bf16.msra.mxu0 %v1456
        %1479 = vmatprep.subr.bf16.mxu0 0
        %1480 = vmatpush1.bf16.msra.mxu0 %v1457
        %1481 = vmatprep.subr.bf16.mxu0 0
        %1482 = vmatpush1.bf16.msra.mxu0 %v1458
        %1483 = vmatprep.subr.bf16.mxu0 0
        %1484 = vmatpush1.bf16.msra.mxu0 0
        %1485 = vmatprep.subr.bf16.mxu0 0
        %1486 = vmatpush1.bf16.msra.mxu0 0
        %1487 = vmatprep.subr.bf16.mxu0 0
        %1488 = vmatpush1.bf16.msra.mxu0 0
        %1489 = vmatprep.subr.bf16.mxu0 0
        %1490 = vmatpush1.bf16.msra.mxu0 0
        %1491 = vmatprep.subr.bf16.mxu0 0
        %1492 = vmatpush1.bf16.msra.mxu0 0
        %1493 = vmatprep.subr.bf16.mxu0 0
        %1494 = vmatpush1.bf16.msra.mxu0 0
        %1495 = vmatprep.subr.bf16.mxu0 0
        %1496 = vmatpush1.bf16.msra.mxu0 0
        %1497 = vmatprep.subr.bf16.mxu0 0
        %1498 = vmatpush1.bf16.msra.mxu0 0
        %1499 = vmatprep.mubr.bf16.mxu0 0
        %1500 = vmatmul.mubr.bf16.gmra.mrb[0].mxu0 %v1395
        %v1501 = vpop.f32.mrb[0].mxu0
        %v1502 = vadd.f32 %v1417, %v1501
        %v1503 = vpop.f32.mrb[0].mxu0
        %v1504 = vpop.f32.mrb[0].mxu0
        %v1505 = vpop.f32.mrb[0].mxu0
        %1506 = vdwg.mxu0
        %v1507 = vadd.f32 %v1326, %v1502
        %v1508 = vsel %vm693, %v1507, 0.0
        %1509 = vadd.xlane.f32.xlu0 %v1508
        %v1510 = vpop.xlane.xlu0 %1509
        %v1511 = vmul.f32 %v1510, %v1302
        %v1512 = vsub.f32 %v1507, %v1511
        %v1513 = vmul.f32 %v1512, %v1512
        %v1514 = vsel %vm693, %v1513, 0.0
        %1515 = vadd.xlane.f32.xlu0 %v1514
        %v1516 = vpop.xlane.xlu0 %1515
        %v1517 = vmul.f32 %v1516, %v1302
        %v1518 = vadd.f32 %v1517, 1e-05
        %v1519 = vrsqrt.pop %v1518
        %v1520 = vmul.f32 %v1512, %v1519
        %v1521 = vmul.f32 %v1520, %v1317
        %v1522 = vadd.f32 %v1521, %v1324
        %1523 = vst.msk [vmem:[%s569] sm:$0xff] %vm693, %v1522
        %s1524 = sand.u32 %s385, 1
        %s1525 = scalar_lea.sflag [#allocation7], %s1524
        %s1526 = sand.u32 %s385, 1
        %s1527 = smul.addr %s1526, 8
        %s1528 = scalar_lea.vmem [#allocation11], %s1527
        // Predicated region
        $region97: #{tpu_custom_call.1} parent=79 // pred_check
          %p1529 = pneg %p395
        $region98: #{tpu_custom_call.1} parent=79 // pred_check_branch
          %1531 = sbr.rel (%p1529) target = $region100
        $region99: #{tpu_custom_call.1} parent=79 // pred_region
          %s1533 = ssub.s32 128, 128
          %1534 = vsyncadd %s1525, %s1533
          %s1535 = sadd.s32 %s36, %s35
          %s1536 = smul.addr %s1535, 128
          %s1537 = scalar_lea.hbm %s15, %s1536
          %s1539 = sshll.u32 %s1528, 4
          %s1540 = int_to_ptr.vmem [resolvable:$true] %s1539
          %1542 = dma.vmem_to_hbm [thread:$0]  %s1540, 128, %s1537, %s1525
        $region100: #{tpu_custom_call.1} parent=79 // pred_fallthru
          _
      $region80: #{tpu_custom_call.1} parent=5 // pred_fallthru
        _
      %p1543 = scmp.le.s32.totalorder 2, %s26
      // Predicated region
      $region101: #{tpu_custom_call.1} parent=5 // pred_check
        %p1544 = pneg %p1543
      $region102: #{tpu_custom_call.1} parent=5 // pred_check_branch
        %1546 = sbr.rel (%p1544) target = $region104
      $region103: #{tpu_custom_call.1} parent=5 // pred_region
        %s1547 = ssub.s32 %s26, 2
        // Predicated region
        $region105: #{tpu_custom_call.1} parent=103 // pred_check
          %p1548 = pneg %p401
        $region106: #{tpu_custom_call.1} parent=103 // pred_check_branch
          %1550 = sbr.rel (%p1548) target = $region108
        $region107: #{tpu_custom_call.1} parent=103 // pred_region
          %s1551 = sand.u32 %s386, 1
          %s1552 = scalar_lea.sflag [#allocation7], %s1551
          %s1553 = sand.u32 %s386, 1
          %s1554 = smul.addr %s1553, 8
          %s1555 = scalar_lea.vmem [#allocation11], %s1554
          %1556 = dma.done %s1552, 128
        $region108: #{tpu_custom_call.1} parent=103 // pred_fallthru
          _
      $region104: #{tpu_custom_call.1} parent=5 // pred_fallthru
        _
    $region6: #{tpu_custom_call.1} parent=1 // loop_footer
      %s30 = sadd.s32 1, %s26
    $region7: #{tpu_custom_call.1} parent=1 // loop_footer_branch
      %25 = sbr.rel target = $region3
    $region8: #{tpu_custom_call.1} parent=1 // loop_exit
      _
    %1557 = vsyncpa [#allocation6], 1
    %s1558 = scalar_lea.sflag [#allocation6], 1
    %1559 = vsyncpa %s1558, 1
    %1560 = vsyncpa [#allocation9], 1
    %1561 = vsyncpa [#allocation7], 1
    %s1562 = scalar_lea.sflag [#allocation7], 1
    %1563 = vsyncpa %s1562, 1

</llo_original>
